<compile_context>
chip_gen: v7x
topology: tpu7x:2x2x1
jax: 0.10.0
libtpu: 0.0.40
codegen_flags: <defaults>
</compile_context>

<pallas_src>
import functools

import numpy as np
import jax
import jax.numpy as jnp
from jax import lax
from jax.experimental import pallas as pl
from jax.experimental.pallas import tpu as pltpu


# ---------------------------------------------------------------------------
# Fused Up-block kernel (single grid step, whole batch resident in VMEM).
# ---------------------------------------------------------------------------
def _up_fused_kernel(ut_ref, mask_ref, x1_ref, x2_ref,
                     w1_ref, b1_ref, wd1_ref, bd1_ref, wd2_ref, bd2_ref,
                     g_ref, bt_ref,
                     o_ref,
                     patch_ref, y1_ref,
                     *, img_w: int, eps: float = 1e-5):
    # ut_ref   : (h*w, H*W) f32  transposed bilinear-x2 matrix (align_corners=True)
    # mask_ref : (9, H*W)   f32  0/1 border-validity mask per 3x3 tap
    # x1_ref   : (N*Out, h*w) f32  deep features, flattened NCHW
    # x2_ref   : (N, In, H*W) f32  skip connection, flattened NCHW
    # w*_ref   : (Cout, 9*Cin) bf16  conv weights, column = (ky*3+kx)*Cin + cin
    # b*/g/bt  : (C, 1) f32
    # o_ref    : (N, Cmid, H*W) f32  output (flattened NCHW)
    # patch_ref: (9*Cmax, H*W) f32  im2col slab (lane-dense)
    # y1_ref   : (N, Cmid, H*W) f32  pre-BN1 activations (kept for batch stats)
    N, _, HW = x2_ref.shape
    Out = x1_ref.shape[0] // N
    Cmid = o_ref.shape[1]
    cnt = float(N * HW)

    masks = mask_ref[...]                                          # (9, HW) f32

    def conv3x3(x_cf, wmat_ref, bias_ref):
        """3x3 SAME conv on a (Cin_c, HW) f32 slab -> (Cout, HW) f32 (+bias).

        im2col: the 9 taps are lane-rolls of the flat image (XLU) with a 0/1
        border mask (VPU), packed into the VMEM patch slab, then one fat MXU
        dot.  bf16 cast happens once, on the assembled patch.
        """
        cin_c = x_cf.shape[0]
        for ky in range(3):
            for kx in range(3):
                t = ky * 3 + kx
                off = (ky - 1) * img_w + (kx - 1)    # flat spatial offset of this tap
                if off == 0:
                    tap = x_cf                        # centre tap: no roll, no mask
                else:
                    tap = pltpu.roll(x_cf, (-off) % HW, axis=1) * masks[t:t + 1, :]
                patch_ref[t * cin_c:(t + 1) * cin_c, :] = tap
        p = patch_ref[0:9 * cin_c, :].astype(jnp.bfloat16)          # cast once per conv
        return jnp.dot(wmat_ref[...], p,
                       preferred_element_type=jnp.float32) + bias_ref[...]

    # ---- bilinear x2 upsample (align_corners=True): one batched matmul -------
    # Kept in f32 so the interpolation weights (k/(n-1) fractions) stay exact.
    x1u_all = jnp.dot(x1_ref[...], ut_ref[...],
                      preferred_element_type=jnp.float32)           # (N*Out, HW)

    # ---- pass A: Up.conv1(x2) ++ DoubleConv.conv1 on the (virtual) concat ----
    s1 = jnp.zeros((Cmid, 1), jnp.float32)
    q1 = jnp.zeros((Cmid, 1), jnp.float32)
    for n in range(N):   # N is tiny here; TODO(synk): lax.fori_loop / grid axis for real batches
        x2c = conv3x3(x2_ref[n], w1_ref, b1_ref)                    # (Out, HW)
        x1u = x1u_all[n * Out:(n + 1) * Out]                        # (Out, HW)
        xc = jnp.concatenate([x2c, x1u], axis=0)                    # (2*Out, HW), VMEM/vreg-only concat
        y1n = conv3x3(xc, wd1_ref, bd1_ref)                         # (Cmid, HW)
        y1_ref[n] = y1n
        s1 = s1 + jnp.sum(y1n, axis=1, keepdims=True)
        q1 = q1 + jnp.sum(y1n * y1n, axis=1, keepdims=True)

    # BatchNorm2d (training mode, biased variance) -- first application.
    mean1 = s1 / cnt
    var1 = jnp.maximum(q1 / cnt - mean1 * mean1, 0.0)
    scale1 = g_ref[...] * lax.rsqrt(var1 + eps)
    shift1 = bt_ref[...] - mean1 * scale1

    # ---- pass B: BN1 + ReLU + DoubleConv.conv2 (pre-BN2 staged in o_ref) -----
    s2 = jnp.zeros((Cmid, 1), jnp.float32)
    q2 = jnp.zeros((Cmid, 1), jnp.float32)
    for n in range(N):
        z1 = jnp.maximum(y1_ref[n] * scale1 + shift1, 0.0)          # (Cmid, HW)
        y2n = conv3x3(z1, wd2_ref, bd2_ref)                         # (Cmid, HW)
        o_ref[n] = y2n
        s2 = s2 + jnp.sum(y2n, axis=1, keepdims=True)
        q2 = q2 + jnp.sum(y2n * y2n, axis=1, keepdims=True)

    # Second application of the SAME BatchNorm2d instance (shared gamma/beta),
    # recomputing batch stats, exactly like the reused self.norm in PyTorch.
    mean2 = s2 / cnt
    var2 = jnp.maximum(q2 / cnt - mean2 * mean2, 0.0)
    scale2 = g_ref[...] * lax.rsqrt(var2 + eps)
    shift2 = bt_ref[...] - mean2 * scale2

    # ---- pass C: BN2 + ReLU, in place on the output block --------------------
    for n in range(N):
        o_ref[n] = jnp.maximum(o_ref[n] * scale2 + shift2, 0.0)
    # TODO(synk): BatchNorm running_mean/running_var buffer updates (training
    # side effect) are not emitted; the forward output does not depend on them.


# ---------------------------------------------------------------------------
# Host-side helpers.
# ---------------------------------------------------------------------------
def _bilinear_matrix(n_out, n_in):
    """(n_out, n_in) linear-interp matrix, PyTorch Upsample align_corners=True."""
    m = np.zeros((n_out, n_in), np.float32)
    if n_in == 1:
        m[:, 0] = 1.0
        return m
    scale = (n_in - 1) / (n_out - 1)
    for i in range(n_out):
        pos = i * scale
        i0 = min(int(np.floor(pos)), n_in - 2)
        f = pos - i0
        m[i, i0] += 1.0 - f
        m[i, i0 + 1] += f
    return m


def _tap_masks(H, W):
    """(9, H*W) 0/1 masks: validity of each 3x3 tap for the flat (C, H*W) layout."""
    yy, xx = np.meshgrid(np.arange(H), np.arange(W), indexing="ij")
    m = np.zeros((9, H * W), np.float32)
    for ky in range(3):
        for kx in range(3):
            valid = ((yy + ky - 1 >= 0) & (yy + ky - 1 < H) &
                     (xx + kx - 1 >= 0) & (xx + kx - 1 < W))
            m[ky * 3 + kx] = valid.reshape(-1).astype(np.float32)
    return m


def _w_mat_bf16(w_oihw):
    """PyTorch (Cout, Cin, 3, 3) -> (Cout, 9*Cin) bf16, col = (ky*3+kx)*Cin + cin."""
    cout, cin = w_oihw.shape[0], w_oihw.shape[1]
    return jnp.transpose(w_oihw, (0, 2, 3, 1)).reshape(cout, 9 * cin).astype(jnp.bfloat16)


def init_up_params(key, In, Out):
    ks = jax.random.split(key, 6)

    def conv_w(k, cin, cout):
        return jax.random.normal(k, (cout, cin, 3, 3), jnp.float32) / jnp.sqrt(9.0 * cin)

    return {
        # Up.conv1 : Conv2d(In, Out, 3, 1, 1)
        "conv1_w": conv_w(ks[0], In, Out),
        "conv1_b": jax.random.normal(ks[1], (Out,), jnp.float32) * 0.01,
        # DoubleConv.conv1 : Conv2d(2*Out, In, 3, 1, 1)
        "dc1_w": conv_w(ks[2], 2 * Out, In),
        "dc1_b": jax.random.normal(ks[3], (In,), jnp.float32) * 0.01,
        # DoubleConv.conv2 : Conv2d(In, In, 3, 1, 1)
        "dc2_w": conv_w(ks[4], In, In),
        "dc2_b": jax.random.normal(ks[5], (In,), jnp.float32) * 0.01,
        # DoubleConv.norm : single shared BatchNorm2d(In) (PyTorch init: 1 / 0)
        "norm_gamma": jnp.ones((In,), jnp.float32),
        "norm_beta": jnp.zeros((In,), jnp.float32),
    }


# ---------------------------------------------------------------------------
# Up.forward(x1, x2), NCHW in / NCHW out (matching PyTorch) — one fused kernel.
# ---------------------------------------------------------------------------
def up_forward(params, x1_nchw, x2_nchw):
    N, Out, h, w = x1_nchw.shape
    _, Cin, H, W = x2_nchw.shape
    assert (H, W) == (2 * h, 2 * w)
    Cmid = params["dc1_w"].shape[0]
    assert Cmid == Cin and params["dc1_w"].shape[1] == 2 * Out
    hw, HW = h * w, H * W

    # Static constants: exact bilinear-x2 matrix (transposed for right-multiply)
    # and the 9 border masks for the flat (C, H*W) layout.
    Ut = jnp.asarray(np.kron(_bilinear_matrix(H, h), _bilinear_matrix(W, w)).T)   # (hw, HW) f32
    masks = jnp.asarray(_tap_masks(H, W))                                         # (9, HW) f32

    # Flattened NCHW: no transposes anywhere in the wrapper.
    x1_flat = x1_nchw.reshape(N * Out, hw).astype(jnp.float32)
    x2_flat = x2_nchw.reshape(N, Cin, HW).astype(jnp.float32)

    w1m = _w_mat_bf16(params["conv1_w"])               # (Out,  9*In)
    wd1m = _w_mat_bf16(params["dc1_w"])                # (Cmid, 9*2*Out)  merged concat halves
    wd2m = _w_mat_bf16(params["dc2_w"])                # (Cmid, 9*Cmid)
    b1 = params["conv1_b"].reshape(Out, 1).astype(jnp.float32)
    bd1 = params["dc1_b"].reshape(Cmid, 1).astype(jnp.float32)
    bd2 = params["dc2_b"].reshape(Cmid, 1).astype(jnp.float32)
    g = params["norm_gamma"].reshape(Cmid, 1).astype(jnp.float32)
    bt = params["norm_beta"].reshape(Cmid, 1).astype(jnp.float32)

    c_patch = max(Cin, 2 * Out, Cmid)
    kernel = functools.partial(_up_fused_kernel, img_w=W)

    out_flat = pl.pallas_call(
        kernel,
        out_shape=jax.ShapeDtypeStruct((N, Cmid, HW), jnp.float32),
        grid=(1,),
        in_specs=[
            pl.BlockSpec((hw, HW), lambda i: (0, 0)),               # Ut
            pl.BlockSpec((9, HW), lambda i: (0, 0)),                # tap masks
            pl.BlockSpec((N * Out, hw), lambda i: (0, 0)),          # x1 (flattened NCHW)
            pl.BlockSpec((N, Cin, HW), lambda i: (0, 0, 0)),        # x2 (flattened NCHW)
            pl.BlockSpec((Out, 9 * Cin), lambda i: (0, 0)),         # Up.conv1 weight
            pl.BlockSpec((Out, 1), lambda i: (0, 0)),               # Up.conv1 bias
            pl.BlockSpec((Cmid, 9 * 2 * Out), lambda i: (0, 0)),    # DC.conv1 weight (merged)
            pl.BlockSpec((Cmid, 1), lambda i: (0, 0)),              # DC.conv1 bias
            pl.BlockSpec((Cmid, 9 * Cmid), lambda i: (0, 0)),       # DC.conv2 weight
            pl.BlockSpec((Cmid, 1), lambda i: (0, 0)),              # DC.conv2 bias
            pl.BlockSpec((Cmid, 1), lambda i: (0, 0)),              # BN gamma
            pl.BlockSpec((Cmid, 1), lambda i: (0, 0)),              # BN beta
        ],
        out_specs=pl.BlockSpec((N, Cmid, HW), lambda i: (0, 0, 0)),
        scratch_shapes=[
            pltpu.VMEM((9 * c_patch, HW), jnp.float32),   # im2col patch slab (lane-dense)
            pltpu.VMEM((N, Cmid, HW), jnp.float32),       # pre-BN1 activations (whole batch)
        ],
        compiler_params=pltpu.CompilerParams(
            dimension_semantics=("arbitrary",),
            vmem_limit_bytes=32 * 1024 * 1024,
        ),
    )(Ut, masks, x1_flat, x2_flat, w1m, b1, wd1m, bd1, wd2m, bd2, g, bt)

    # Output is already flattened NCHW — just reshape, no transpose.
    return out_flat.reshape(N, Cmid, H, W)


# ---------------------------------------------------------------------------
# Pure-JAX f32 reference (for a loose sanity check only).
# ---------------------------------------------------------------------------
def _up_forward_ref(params, x1, x2):
    N, Out, h, w = x1.shape
    H, W = 2 * h, 2 * w
    U = jnp.asarray(np.kron(_bilinear_matrix(H, h), _bilinear_matrix(W, w)))
    x1u = jnp.einsum("pq,ncq->ncp", U, x1.reshape(N, Out, h * w)).reshape(N, Out, H, W)

    def conv(x, wgt, b):
        y = lax.conv_general_dilated(x, wgt, (1, 1), ((1, 1), (1, 1)),
                                     dimension_numbers=("NCHW", "OIHW", "NCHW"))
        return y + b[None, :, None, None]

    def bn_relu(x, gamma, beta, eps=1e-5):
        mean = jnp.mean(x, axis=(0, 2, 3), keepdims=True)
        var = jnp.mean(jnp.square(x - mean), axis=(0, 2, 3), keepdims=True)
        xh = (x - mean) * lax.rsqrt(var + eps)
        return jnp.maximum(xh * gamma[None, :, None, None] + beta[None, :, None, None], 0.0)

    x2c = conv(x2, params["conv1_w"], params["conv1_b"])
    xcat = jnp.concatenate([x2c, x1u], axis=1)
    y1 = conv(xcat, params["dc1_w"], params["dc1_b"])
    z1 = bn_relu(y1, params["norm_gamma"], params["norm_beta"])
    y2 = conv(z1, params["dc2_w"], params["dc2_b"])
    return bn_relu(y2, params["norm_gamma"], params["norm_beta"])


if __name__ == "__main__":
    key = jax.random.PRNGKey(0)
    In, Out = 8, 4
    N, h, w = 2, 8, 8                        # x1 spatial; x2 is 2x larger (16x16)

    k1, k2, kp = jax.random.split(key, 3)
    x1 = jax.random.normal(k1, (N, Out, h, w), jnp.float32)          # deep features
    x2 = jax.random.normal(k2, (N, In, 2 * h, 2 * w), jnp.float32)   # skip connection

    params = init_up_params(kp, In, Out)

    out = jax.jit(up_forward)(params, x1, x2)
    out = jax.block_until_ready(out)

    assert out.shape == (N, In, 2 * h, 2 * w), out.shape
    assert bool(jnp.all(jnp.isfinite(out)))

    # Loose check vs. a pure-JAX f32 reference (kernel uses bf16 MXU operands
    # for the convs, so small deviations are expected; gross layout/roll
    # mistakes would blow way past this bound).
    ref = _up_forward_ref(params, x1, x2)
    max_err = float(jnp.max(jnp.abs(out - ref)))
    assert max_err < 0.25, f"max |out - ref| too large: {max_err}"

    print("KERNEL_OK")
</pallas_src>

<mosaic_0001>
module attributes {stable_mosaic.version = 11 : i64} {
  func.func @_up_fused_kernel(%arg0: i32, %arg1: memref<64x256xf32, #tpu.memory_space<vmem>>, %arg2: memref<9x256xf32, #tpu.memory_space<vmem>>, %arg3: memref<8x64xf32, #tpu.memory_space<vmem>>, %arg4: memref<2x8x256xf32, #tpu.memory_space<vmem>>, %arg5: memref<4x72xbf16, #tpu.memory_space<vmem>>, %arg6: memref<4x1xf32, #tpu.memory_space<vmem>>, %arg7: memref<8x72xbf16, #tpu.memory_space<vmem>>, %arg8: memref<8x1xf32, #tpu.memory_space<vmem>>, %arg9: memref<8x72xbf16, #tpu.memory_space<vmem>>, %arg10: memref<8x1xf32, #tpu.memory_space<vmem>>, %arg11: memref<8x1xf32, #tpu.memory_space<vmem>>, %arg12: memref<8x1xf32, #tpu.memory_space<vmem>>, %arg13: memref<2x8x256xf32, #tpu.memory_space<vmem>>, %arg14: memref<72x256xf32, #tpu.memory_space<vmem>>, %arg15: memref<2x8x256xf32, #tpu.memory_space<vmem>>) attributes {dimension_semantics = [#tpu.dimension_semantics<arbitrary>], iteration_bounds = array<i64: 1>, scalar_prefetch = 0 : i64, scratch_operands = 2 : i64, tpu.core_type = #tpu.core_type<tc>, window_params = [{pipeline_mode = #tpu.pipeline_mode<synchronous>, transform_indices = @transform_0, window_bounds = array<i64: 64, 256>}, {pipeline_mode = #tpu.pipeline_mode<synchronous>, transform_indices = @transform_1, window_bounds = array<i64: 9, 256>}, {pipeline_mode = #tpu.pipeline_mode<synchronous>, transform_indices = @transform_2, window_bounds = array<i64: 8, 64>}, {pipeline_mode = #tpu.pipeline_mode<synchronous>, transform_indices = @transform_3, window_bounds = array<i64: 2, 8, 256>}, {pipeline_mode = #tpu.pipeline_mode<synchronous>, transform_indices = @transform_4, window_bounds = array<i64: 4, 72>}, {pipeline_mode = #tpu.pipeline_mode<synchronous>, transform_indices = @transform_5, window_bounds = array<i64: 4, 1>}, {pipeline_mode = #tpu.pipeline_mode<synchronous>, transform_indices = @transform_6, window_bounds = array<i64: 8, 72>}, {pipeline_mode = #tpu.pipeline_mode<synchronous>, transform_indices = @transform_7, window_bounds = array<i64: 8, 1>}, {pipeline_mode = #tpu.pipeline_mode<synchronous>, transform_indices = @transform_8, window_bounds = array<i64: 8, 72>}, {pipeline_mode = #tpu.pipeline_mode<synchronous>, transform_indices = @transform_9, window_bounds = array<i64: 8, 1>}, {pipeline_mode = #tpu.pipeline_mode<synchronous>, transform_indices = @transform_10, window_bounds = array<i64: 8, 1>}, {pipeline_mode = #tpu.pipeline_mode<synchronous>, transform_indices = @transform_11, window_bounds = array<i64: 8, 1>}, {pipeline_mode = #tpu.pipeline_mode<synchronous>, transform_indices = @transform_12, window_bounds = array<i64: 2, 8, 256>}]} {
    %c0 = arith.constant 0 : index
    %c0_0 = arith.constant 0 : index
    %0 = vector.load %arg2[%c0, %c0_0] : memref<9x256xf32, #tpu.memory_space<vmem>>, vector<9x256xf32>
    %c0_1 = arith.constant 0 : index
    %c0_2 = arith.constant 0 : index
    %1 = vector.load %arg3[%c0_1, %c0_2] : memref<8x64xf32, #tpu.memory_space<vmem>>, vector<8x64xf32>
    %c0_3 = arith.constant 0 : index
    %c0_4 = arith.constant 0 : index
    %2 = vector.load %arg1[%c0_3, %c0_4] : memref<64x256xf32, #tpu.memory_space<vmem>>, vector<64x256xf32>
    %cst = arith.constant dense<0.000000e+00> : vector<8x256xf32>
    %3 = tpu.matmul %1, %2, %cst {dimension_numbers = #tpu.dot_dimension_numbers<[1], [0], [0], [1], [0, 0, 1, 1], [], []>} : vector<8x64xf32>, vector<64x256xf32>, vector<8x256xf32> -> vector<8x256xf32>
    %cst_5 = arith.constant 0.000000e+00 : f32
    %4 = vector.broadcast %cst_5 : f32 to vector<8x1xf32>
    %cst_6 = arith.constant 0.000000e+00 : f32
    %5 = vector.broadcast %cst_6 : f32 to vector<8x1xf32>
    %c0_7 = arith.constant 0 : index
    %c0_8 = arith.constant 0 : index
    %c0_9 = arith.constant 0 : index
    %6 = vector.load %arg4[%c0_7, %c0_8, %c0_9] : memref<2x8x256xf32, #tpu.memory_space<vmem>>, vector<1x8x256xf32>
    %7 = vector.shape_cast %6 : vector<1x8x256xf32> to vector<8x256xf32>
    %c17_i32 = arith.constant 17 : i32
    %8 = tpu.dynamic_rotate %7 by %c17_i32 dim 1 : vector<8x256xf32>, i32 -> vector<8x256xf32>
    %9 = vector.extract_strided_slice %0 {offsets = [0, 0], sizes = [1, 256], strides = [1, 1]} : vector<9x256xf32> to vector<1x256xf32>
    %10 = vector.broadcast %9 : vector<1x256xf32> to vector<8x256xf32>
    %11 = arith.mulf %8, %10 : vector<8x256xf32>
    %c0_10 = arith.constant 0 : index
    %c0_11 = arith.constant 0 : index
    %12 = vector.load %arg14[%c0_10, %c0_11] : memref<72x256xf32, #tpu.memory_space<vmem>>, vector<8x256xf32>
    tpu.vector_store %arg14[%c0_10, %c0_11], %11 {strides = array<i32>} : memref<72x256xf32, #tpu.memory_space<vmem>>, vector<8x256xf32>,
    %c16_i32 = arith.constant 16 : i32
    %13 = tpu.dynamic_rotate %7 by %c16_i32 dim 1 : vector<8x256xf32>, i32 -> vector<8x256xf32>
    %14 = vector.extract_strided_slice %0 {offsets = [1, 0], sizes = [1, 256], strides = [1, 1]} : vector<9x256xf32> to vector<1x256xf32>
    %15 = vector.broadcast %14 : vector<1x256xf32> to vector<8x256xf32>
    %16 = arith.mulf %13, %15 : vector<8x256xf32>
    %c8 = arith.constant 8 : index
    %c0_12 = arith.constant 0 : index
    %17 = vector.load %arg14[%c8, %c0_12] : memref<72x256xf32, #tpu.memory_space<vmem>>, vector<8x256xf32>
    tpu.vector_store %arg14[%c8, %c0_12], %16 {strides = array<i32>} : memref<72x256xf32, #tpu.memory_space<vmem>>, vector<8x256xf32>,
    %c15_i32 = arith.constant 15 : i32
    %18 = tpu.dynamic_rotate %7 by %c15_i32 dim 1 : vector<8x256xf32>, i32 -> vector<8x256xf32>
    %19 = vector.extract_strided_slice %0 {offsets = [2, 0], sizes = [1, 256], strides = [1, 1]} : vector<9x256xf32> to vector<1x256xf32>
    %20 = vector.broadcast %19 : vector<1x256xf32> to vector<8x256xf32>
    %21 = arith.mulf %18, %20 : vector<8x256xf32>
    %c16 = arith.constant 16 : index
    %c0_13 = arith.constant 0 : index
    %22 = vector.load %arg14[%c16, %c0_13] : memref<72x256xf32, #tpu.memory_space<vmem>>, vector<8x256xf32>
    tpu.vector_store %arg14[%c16, %c0_13], %21 {strides = array<i32>} : memref<72x256xf32, #tpu.memory_space<vmem>>, vector<8x256xf32>,
    %c1_i32 = arith.constant 1 : i32
    %23 = tpu.dynamic_rotate %7 by %c1_i32 dim 1 : vector<8x256xf32>, i32 -> vector<8x256xf32>
    %24 = vector.extract_strided_slice %0 {offsets = [3, 0], sizes = [1, 256], strides = [1, 1]} : vector<9x256xf32> to vector<1x256xf32>
    %25 = vector.broadcast %24 : vector<1x256xf32> to vector<8x256xf32>
    %26 = arith.mulf %23, %25 : vector<8x256xf32>
    %c24 = arith.constant 24 : index
    %c0_14 = arith.constant 0 : index
    %27 = vector.load %arg14[%c24, %c0_14] : memref<72x256xf32, #tpu.memory_space<vmem>>, vector<8x256xf32>
    tpu.vector_store %arg14[%c24, %c0_14], %26 {strides = array<i32>} : memref<72x256xf32, #tpu.memory_space<vmem>>, vector<8x256xf32>,
    %c32 = arith.constant 32 : index
    %c0_15 = arith.constant 0 : index
    %28 = vector.load %arg14[%c32, %c0_15] : memref<72x256xf32, #tpu.memory_space<vmem>>, vector<8x256xf32>
    tpu.vector_store %arg14[%c32, %c0_15], %7 {strides = array<i32>} : memref<72x256xf32, #tpu.memory_space<vmem>>, vector<8x256xf32>,
    %c255_i32 = arith.constant 255 : i32
    %29 = tpu.dynamic_rotate %7 by %c255_i32 dim 1 : vector<8x256xf32>, i32 -> vector<8x256xf32>
    %30 = vector.extract_strided_slice %0 {offsets = [5, 0], sizes = [1, 256], strides = [1, 1]} : vector<9x256xf32> to vector<1x256xf32>
    %31 = vector.broadcast %30 : vector<1x256xf32> to vector<8x256xf32>
    %32 = arith.mulf %29, %31 : vector<8x256xf32>
    %c40 = arith.constant 40 : index
    %c0_16 = arith.constant 0 : index
    %33 = vector.load %arg14[%c40, %c0_16] : memref<72x256xf32, #tpu.memory_space<vmem>>, vector<8x256xf32>
    tpu.vector_store %arg14[%c40, %c0_16], %32 {strides = array<i32>} : memref<72x256xf32, #tpu.memory_space<vmem>>, vector<8x256xf32>,
    %c241_i32 = arith.constant 241 : i32
    %34 = tpu.dynamic_rotate %7 by %c241_i32 dim 1 : vector<8x256xf32>, i32 -> vector<8x256xf32>
    %35 = vector.extract_strided_slice %0 {offsets = [6, 0], sizes = [1, 256], strides = [1, 1]} : vector<9x256xf32> to vector<1x256xf32>
    %36 = vector.broadcast %35 : vector<1x256xf32> to vector<8x256xf32>
    %37 = arith.mulf %34, %36 : vector<8x256xf32>
    %c48 = arith.constant 48 : index
    %c0_17 = arith.constant 0 : index
    %38 = vector.load %arg14[%c48, %c0_17] : memref<72x256xf32, #tpu.memory_space<vmem>>, vector<8x256xf32>
    tpu.vector_store %arg14[%c48, %c0_17], %37 {strides = array<i32>} : memref<72x256xf32, #tpu.memory_space<vmem>>, vector<8x256xf32>,
    %c240_i32 = arith.constant 240 : i32
    %39 = tpu.dynamic_rotate %7 by %c240_i32 dim 1 : vector<8x256xf32>, i32 -> vector<8x256xf32>
    %40 = vector.extract_strided_slice %0 {offsets = [7, 0], sizes = [1, 256], strides = [1, 1]} : vector<9x256xf32> to vector<1x256xf32>
    %41 = vector.broadcast %40 : vector<1x256xf32> to vector<8x256xf32>
    %42 = arith.mulf %39, %41 : vector<8x256xf32>
    %c56 = arith.constant 56 : index
    %c0_18 = arith.constant 0 : index
    %43 = vector.load %arg14[%c56, %c0_18] : memref<72x256xf32, #tpu.memory_space<vmem>>, vector<8x256xf32>
    tpu.vector_store %arg14[%c56, %c0_18], %42 {strides = array<i32>} : memref<72x256xf32, #tpu.memory_space<vmem>>, vector<8x256xf32>,
    %c239_i32 = arith.constant 239 : i32
    %44 = tpu.dynamic_rotate %7 by %c239_i32 dim 1 : vector<8x256xf32>, i32 -> vector<8x256xf32>
    %45 = vector.extract_strided_slice %0 {offsets = [8, 0], sizes = [1, 256], strides = [1, 1]} : vector<9x256xf32> to vector<1x256xf32>
    %46 = vector.broadcast %45 : vector<1x256xf32> to vector<8x256xf32>
    %47 = arith.mulf %44, %46 : vector<8x256xf32>
    %c64 = arith.constant 64 : index
    %c0_19 = arith.constant 0 : index
    %48 = vector.load %arg14[%c64, %c0_19] : memref<72x256xf32, #tpu.memory_space<vmem>>, vector<8x256xf32>
    tpu.vector_store %arg14[%c64, %c0_19], %47 {strides = array<i32>} : memref<72x256xf32, #tpu.memory_space<vmem>>, vector<8x256xf32>,
    %c0_20 = arith.constant 0 : index
    %c0_21 = arith.constant 0 : index
    %49 = vector.load %arg14[%c0_20, %c0_21] : memref<72x256xf32, #tpu.memory_space<vmem>>, vector<72x256xf32>
    %50 = arith.truncf %49 : vector<72x256xf32> to vector<72x256xbf16>
    %c0_22 = arith.constant 0 : index
    %c0_23 = arith.constant 0 : index
    %51 = vector.load %arg5[%c0_22, %c0_23] : memref<4x72xbf16, #tpu.memory_space<vmem>>, vector<4x72xbf16>
    %cst_24 = arith.constant dense<0.000000e+00> : vector<4x256xf32>
    %52 = tpu.matmul %51, %50, %cst_24 {dimension_numbers = #tpu.dot_dimension_numbers<[1], [0], [0], [1], [0, 0, 1, 1], [], []>} : vector<4x72xbf16>, vector<72x256xbf16>, vector<4x256xf32> -> vector<4x256xf32>
    %c0_25 = arith.constant 0 : index
    %c0_26 = arith.constant 0 : index
    %53 = vector.load %arg6[%c0_25, %c0_26] : memref<4x1xf32, #tpu.memory_space<vmem>>, vector<4x1xf32>
    %54 = vector.broadcast %53 : vector<4x1xf32> to vector<4x256xf32>
    %55 = arith.addf %52, %54 : vector<4x256xf32>
    %56 = vector.extract_strided_slice %3 {offsets = [0, 0], sizes = [4, 256], strides = [1, 1]} : vector<8x256xf32> to vector<4x256xf32>
    %57 = tpu.concatenate %55, %56 in 0 : vector<4x256xf32>, vector<4x256xf32> -> vector<8x256xf32>
    %c17_i32_27 = arith.constant 17 : i32
    %58 = tpu.dynamic_rotate %57 by %c17_i32_27 dim 1 : vector<8x256xf32>, i32 -> vector<8x256xf32>
    %59 = vector.extract_strided_slice %0 {offsets = [0, 0], sizes = [1, 256], strides = [1, 1]} : vector<9x256xf32> to vector<1x256xf32>
    %60 = vector.broadcast %59 : vector<1x256xf32> to vector<8x256xf32>
    %61 = arith.mulf %58, %60 : vector<8x256xf32>
    %c0_28 = arith.constant 0 : index
    %c0_29 = arith.constant 0 : index
    %62 = vector.load %arg14[%c0_28, %c0_29] : memref<72x256xf32, #tpu.memory_space<vmem>>, vector<8x256xf32>
    tpu.vector_store %arg14[%c0_28, %c0_29], %61 {strides = array<i32>} : memref<72x256xf32, #tpu.memory_space<vmem>>, vector<8x256xf32>,
    %c16_i32_30 = arith.constant 16 : i32
    %63 = tpu.dynamic_rotate %57 by %c16_i32_30 dim 1 : vector<8x256xf32>, i32 -> vector<8x256xf32>
    %64 = vector.extract_strided_slice %0 {offsets = [1, 0], sizes = [1, 256], strides = [1, 1]} : vector<9x256xf32> to vector<1x256xf32>
    %65 = vector.broadcast %64 : vector<1x256xf32> to vector<8x256xf32>
    %66 = arith.mulf %63, %65 : vector<8x256xf32>
    %c8_31 = arith.constant 8 : index
    %c0_32 = arith.constant 0 : index
    %67 = vector.load %arg14[%c8_31, %c0_32] : memref<72x256xf32, #tpu.memory_space<vmem>>, vector<8x256xf32>
    tpu.vector_store %arg14[%c8_31, %c0_32], %66 {strides = array<i32>} : memref<72x256xf32, #tpu.memory_space<vmem>>, vector<8x256xf32>,
    %c15_i32_33 = arith.constant 15 : i32
    %68 = tpu.dynamic_rotate %57 by %c15_i32_33 dim 1 : vector<8x256xf32>, i32 -> vector<8x256xf32>
    %69 = vector.extract_strided_slice %0 {offsets = [2, 0], sizes = [1, 256], strides = [1, 1]} : vector<9x256xf32> to vector<1x256xf32>
    %70 = vector.broadcast %69 : vector<1x256xf32> to vector<8x256xf32>
    %71 = arith.mulf %68, %70 : vector<8x256xf32>
    %c16_34 = arith.constant 16 : index
    %c0_35 = arith.constant 0 : index
    %72 = vector.load %arg14[%c16_34, %c0_35] : memref<72x256xf32, #tpu.memory_space<vmem>>, vector<8x256xf32>
    tpu.vector_store %arg14[%c16_34, %c0_35], %71 {strides = array<i32>} : memref<72x256xf32, #tpu.memory_space<vmem>>, vector<8x256xf32>,
    %c1_i32_36 = arith.constant 1 : i32
    %73 = tpu.dynamic_rotate %57 by %c1_i32_36 dim 1 : vector<8x256xf32>, i32 -> vector<8x256xf32>
    %74 = vector.extract_strided_slice %0 {offsets = [3, 0], sizes = [1, 256], strides = [1, 1]} : vector<9x256xf32> to vector<1x256xf32>
    %75 = vector.broadcast %74 : vector<1x256xf32> to vector<8x256xf32>
    %76 = arith.mulf %73, %75 : vector<8x256xf32>
    %c24_37 = arith.constant 24 : index
    %c0_38 = arith.constant 0 : index
    %77 = vector.load %arg14[%c24_37, %c0_38] : memref<72x256xf32, #tpu.memory_space<vmem>>, vector<8x256xf32>
    tpu.vector_store %arg14[%c24_37, %c0_38], %76 {strides = array<i32>} : memref<72x256xf32, #tpu.memory_space<vmem>>, vector<8x256xf32>,
    %c32_39 = arith.constant 32 : index
    %c0_40 = arith.constant 0 : index
    %78 = vector.load %arg14[%c32_39, %c0_40] : memref<72x256xf32, #tpu.memory_space<vmem>>, vector<8x256xf32>
    tpu.vector_store %arg14[%c32_39, %c0_40], %57 {strides = array<i32>} : memref<72x256xf32, #tpu.memory_space<vmem>>, vector<8x256xf32>,
    %c255_i32_41 = arith.constant 255 : i32
    %79 = tpu.dynamic_rotate %57 by %c255_i32_41 dim 1 : vector<8x256xf32>, i32 -> vector<8x256xf32>
    %80 = vector.extract_strided_slice %0 {offsets = [5, 0], sizes = [1, 256], strides = [1, 1]} : vector<9x256xf32> to vector<1x256xf32>
    %81 = vector.broadcast %80 : vector<1x256xf32> to vector<8x256xf32>
    %82 = arith.mulf %79, %81 : vector<8x256xf32>
    %c40_42 = arith.constant 40 : index
    %c0_43 = arith.constant 0 : index
    %83 = vector.load %arg14[%c40_42, %c0_43] : memref<72x256xf32, #tpu.memory_space<vmem>>, vector<8x256xf32>
    tpu.vector_store %arg14[%c40_42, %c0_43], %82 {strides = array<i32>} : memref<72x256xf32, #tpu.memory_space<vmem>>, vector<8x256xf32>,
    %c241_i32_44 = arith.constant 241 : i32
    %84 = tpu.dynamic_rotate %57 by %c241_i32_44 dim 1 : vector<8x256xf32>, i32 -> vector<8x256xf32>
    %85 = vector.extract_strided_slice %0 {offsets = [6, 0], sizes = [1, 256], strides = [1, 1]} : vector<9x256xf32> to vector<1x256xf32>
    %86 = vector.broadcast %85 : vector<1x256xf32> to vector<8x256xf32>
    %87 = arith.mulf %84, %86 : vector<8x256xf32>
    %c48_45 = arith.constant 48 : index
    %c0_46 = arith.constant 0 : index
    %88 = vector.load %arg14[%c48_45, %c0_46] : memref<72x256xf32, #tpu.memory_space<vmem>>, vector<8x256xf32>
    tpu.vector_store %arg14[%c48_45, %c0_46], %87 {strides = array<i32>} : memref<72x256xf32, #tpu.memory_space<vmem>>, vector<8x256xf32>,
    %c240_i32_47 = arith.constant 240 : i32
    %89 = tpu.dynamic_rotate %57 by %c240_i32_47 dim 1 : vector<8x256xf32>, i32 -> vector<8x256xf32>
    %90 = vector.extract_strided_slice %0 {offsets = [7, 0], sizes = [1, 256], strides = [1, 1]} : vector<9x256xf32> to vector<1x256xf32>
    %91 = vector.broadcast %90 : vector<1x256xf32> to vector<8x256xf32>
    %92 = arith.mulf %89, %91 : vector<8x256xf32>
    %c56_48 = arith.constant 56 : index
    %c0_49 = arith.constant 0 : index
    %93 = vector.load %arg14[%c56_48, %c0_49] : memref<72x256xf32, #tpu.memory_space<vmem>>, vector<8x256xf32>
    tpu.vector_store %arg14[%c56_48, %c0_49], %92 {strides = array<i32>} : memref<72x256xf32, #tpu.memory_space<vmem>>, vector<8x256xf32>,
    %c239_i32_50 = arith.constant 239 : i32
    %94 = tpu.dynamic_rotate %57 by %c239_i32_50 dim 1 : vector<8x256xf32>, i32 -> vector<8x256xf32>
    %95 = vector.extract_strided_slice %0 {offsets = [8, 0], sizes = [1, 256], strides = [1, 1]} : vector<9x256xf32> to vector<1x256xf32>
    %96 = vector.broadcast %95 : vector<1x256xf32> to vector<8x256xf32>
    %97 = arith.mulf %94, %96 : vector<8x256xf32>
    %c64_51 = arith.constant 64 : index
    %c0_52 = arith.constant 0 : index
    %98 = vector.load %arg14[%c64_51, %c0_52] : memref<72x256xf32, #tpu.memory_space<vmem>>, vector<8x256xf32>
    tpu.vector_store %arg14[%c64_51, %c0_52], %97 {strides = array<i32>} : memref<72x256xf32, #tpu.memory_space<vmem>>, vector<8x256xf32>,
    %c0_53 = arith.constant 0 : index
    %c0_54 = arith.constant 0 : index
    %99 = vector.load %arg14[%c0_53, %c0_54] : memref<72x256xf32, #tpu.memory_space<vmem>>, vector<72x256xf32>
    %100 = arith.truncf %99 : vector<72x256xf32> to vector<72x256xbf16>
    %c0_55 = arith.constant 0 : index
    %c0_56 = arith.constant 0 : index
    %101 = vector.load %arg7[%c0_55, %c0_56] : memref<8x72xbf16, #tpu.memory_space<vmem>>, vector<8x72xbf16>
    %cst_57 = arith.constant dense<0.000000e+00> : vector<8x256xf32>
    %102 = tpu.matmul %101, %100, %cst_57 {dimension_numbers = #tpu.dot_dimension_numbers<[1], [0], [0], [1], [0, 0, 1, 1], [], []>} : vector<8x72xbf16>, vector<72x256xbf16>, vector<8x256xf32> -> vector<8x256xf32>
    %c0_58 = arith.constant 0 : index
    %c0_59 = arith.constant 0 : index
    %103 = vector.load %arg8[%c0_58, %c0_59] : memref<8x1xf32, #tpu.memory_space<vmem>>, vector<8x1xf32>
    %104 = vector.broadcast %103 : vector<8x1xf32> to vector<8x256xf32>
    %105 = arith.addf %102, %104 : vector<8x256xf32>
    %c0_60 = arith.constant 0 : index
    %c0_61 = arith.constant 0 : index
    %c0_62 = arith.constant 0 : index
    %106 = vector.load %arg15[%c0_60, %c0_61, %c0_62] : memref<2x8x256xf32, #tpu.memory_space<vmem>>, vector<1x8x256xf32>
    %107 = vector.shape_cast %106 : vector<1x8x256xf32> to vector<8x256xf32>
    %108 = vector.shape_cast %105 : vector<8x256xf32> to vector<1x8x256xf32>
    tpu.vector_store %arg15[%c0_60, %c0_61, %c0_62], %108 {strides = array<i32>} : memref<2x8x256xf32, #tpu.memory_space<vmem>>, vector<1x8x256xf32>,
    %cst_63 = arith.constant dense<0.000000e+00> : vector<8xf32>
    %109 = vector.multi_reduction <add>, %105, %cst_63 [1] : vector<8x256xf32> to vector<8xf32>
    %110 = vector.shape_cast %109 : vector<8xf32> to vector<8x1xf32>
    %111 = arith.addf %4, %110 : vector<8x1xf32>
    %112 = arith.mulf %105, %105 : vector<8x256xf32>
    %cst_64 = arith.constant dense<0.000000e+00> : vector<8xf32>
    %113 = vector.multi_reduction <add>, %112, %cst_64 [1] : vector<8x256xf32> to vector<8xf32>
    %114 = vector.shape_cast %113 : vector<8xf32> to vector<8x1xf32>
    %115 = arith.addf %5, %114 : vector<8x1xf32>
    %c1 = arith.constant 1 : index
    %c0_65 = arith.constant 0 : index
    %c0_66 = arith.constant 0 : index
    %116 = vector.load %arg4[%c1, %c0_65, %c0_66] : memref<2x8x256xf32, #tpu.memory_space<vmem>>, vector<1x8x256xf32>
    %117 = vector.shape_cast %116 : vector<1x8x256xf32> to vector<8x256xf32>
    %c17_i32_67 = arith.constant 17 : i32
    %118 = tpu.dynamic_rotate %117 by %c17_i32_67 dim 1 : vector<8x256xf32>, i32 -> vector<8x256xf32>
    %119 = vector.extract_strided_slice %0 {offsets = [0, 0], sizes = [1, 256], strides = [1, 1]} : vector<9x256xf32> to vector<1x256xf32>
    %120 = vector.broadcast %119 : vector<1x256xf32> to vector<8x256xf32>
    %121 = arith.mulf %118, %120 : vector<8x256xf32>
    %c0_68 = arith.constant 0 : index
    %c0_69 = arith.constant 0 : index
    %122 = vector.load %arg14[%c0_68, %c0_69] : memref<72x256xf32, #tpu.memory_space<vmem>>, vector<8x256xf32>
    tpu.vector_store %arg14[%c0_68, %c0_69], %121 {strides = array<i32>} : memref<72x256xf32, #tpu.memory_space<vmem>>, vector<8x256xf32>,
    %c16_i32_70 = arith.constant 16 : i32
    %123 = tpu.dynamic_rotate %117 by %c16_i32_70 dim 1 : vector<8x256xf32>, i32 -> vector<8x256xf32>
    %124 = vector.extract_strided_slice %0 {offsets = [1, 0], sizes = [1, 256], strides = [1, 1]} : vector<9x256xf32> to vector<1x256xf32>
    %125 = vector.broadcast %124 : vector<1x256xf32> to vector<8x256xf32>
    %126 = arith.mulf %123, %125 : vector<8x256xf32>
    %c8_71 = arith.constant 8 : index
    %c0_72 = arith.constant 0 : index
    %127 = vector.load %arg14[%c8_71, %c0_72] : memref<72x256xf32, #tpu.memory_space<vmem>>, vector<8x256xf32>
    tpu.vector_store %arg14[%c8_71, %c0_72], %126 {strides = array<i32>} : memref<72x256xf32, #tpu.memory_space<vmem>>, vector<8x256xf32>,
    %c15_i32_73 = arith.constant 15 : i32
    %128 = tpu.dynamic_rotate %117 by %c15_i32_73 dim 1 : vector<8x256xf32>, i32 -> vector<8x256xf32>
    %129 = vector.extract_strided_slice %0 {offsets = [2, 0], sizes = [1, 256], strides = [1, 1]} : vector<9x256xf32> to vector<1x256xf32>
    %130 = vector.broadcast %129 : vector<1x256xf32> to vector<8x256xf32>
    %131 = arith.mulf %128, %130 : vector<8x256xf32>
    %c16_74 = arith.constant 16 : index
    %c0_75 = arith.constant 0 : index
    %132 = vector.load %arg14[%c16_74, %c0_75] : memref<72x256xf32, #tpu.memory_space<vmem>>, vector<8x256xf32>
    tpu.vector_store %arg14[%c16_74, %c0_75], %131 {strides = array<i32>} : memref<72x256xf32, #tpu.memory_space<vmem>>, vector<8x256xf32>,
    %c1_i32_76 = arith.constant 1 : i32
    %133 = tpu.dynamic_rotate %117 by %c1_i32_76 dim 1 : vector<8x256xf32>, i32 -> vector<8x256xf32>
    %134 = vector.extract_strided_slice %0 {offsets = [3, 0], sizes = [1, 256], strides = [1, 1]} : vector<9x256xf32> to vector<1x256xf32>
    %135 = vector.broadcast %134 : vector<1x256xf32> to vector<8x256xf32>
    %136 = arith.mulf %133, %135 : vector<8x256xf32>
    %c24_77 = arith.constant 24 : index
    %c0_78 = arith.constant 0 : index
    %137 = vector.load %arg14[%c24_77, %c0_78] : memref<72x256xf32, #tpu.memory_space<vmem>>, vector<8x256xf32>
    tpu.vector_store %arg14[%c24_77, %c0_78], %136 {strides = array<i32>} : memref<72x256xf32, #tpu.memory_space<vmem>>, vector<8x256xf32>,
    %c32_79 = arith.constant 32 : index
    %c0_80 = arith.constant 0 : index
    %138 = vector.load %arg14[%c32_79, %c0_80] : memref<72x256xf32, #tpu.memory_space<vmem>>, vector<8x256xf32>
    tpu.vector_store %arg14[%c32_79, %c0_80], %117 {strides = array<i32>} : memref<72x256xf32, #tpu.memory_space<vmem>>, vector<8x256xf32>,
    %c255_i32_81 = arith.constant 255 : i32
    %139 = tpu.dynamic_rotate %117 by %c255_i32_81 dim 1 : vector<8x256xf32>, i32 -> vector<8x256xf32>
    %140 = vector.extract_strided_slice %0 {offsets = [5, 0], sizes = [1, 256], strides = [1, 1]} : vector<9x256xf32> to vector<1x256xf32>
    %141 = vector.broadcast %140 : vector<1x256xf32> to vector<8x256xf32>
    %142 = arith.mulf %139, %141 : vector<8x256xf32>
    %c40_82 = arith.constant 40 : index
    %c0_83 = arith.constant 0 : index
    %143 = vector.load %arg14[%c40_82, %c0_83] : memref<72x256xf32, #tpu.memory_space<vmem>>, vector<8x256xf32>
    tpu.vector_store %arg14[%c40_82, %c0_83], %142 {strides = array<i32>} : memref<72x256xf32, #tpu.memory_space<vmem>>, vector<8x256xf32>,
    %c241_i32_84 = arith.constant 241 : i32
    %144 = tpu.dynamic_rotate %117 by %c241_i32_84 dim 1 : vector<8x256xf32>, i32 -> vector<8x256xf32>
    %145 = vector.extract_strided_slice %0 {offsets = [6, 0], sizes = [1, 256], strides = [1, 1]} : vector<9x256xf32> to vector<1x256xf32>
    %146 = vector.broadcast %145 : vector<1x256xf32> to vector<8x256xf32>
    %147 = arith.mulf %144, %146 : vector<8x256xf32>
    %c48_85 = arith.constant 48 : index
    %c0_86 = arith.constant 0 : index
    %148 = vector.load %arg14[%c48_85, %c0_86] : memref<72x256xf32, #tpu.memory_space<vmem>>, vector<8x256xf32>
    tpu.vector_store %arg14[%c48_85, %c0_86], %147 {strides = array<i32>} : memref<72x256xf32, #tpu.memory_space<vmem>>, vector<8x256xf32>,
    %c240_i32_87 = arith.constant 240 : i32
    %149 = tpu.dynamic_rotate %117 by %c240_i32_87 dim 1 : vector<8x256xf32>, i32 -> vector<8x256xf32>
    %150 = vector.extract_strided_slice %0 {offsets = [7, 0], sizes = [1, 256], strides = [1, 1]} : vector<9x256xf32> to vector<1x256xf32>
    %151 = vector.broadcast %150 : vector<1x256xf32> to vector<8x256xf32>
    %152 = arith.mulf %149, %151 : vector<8x256xf32>
    %c56_88 = arith.constant 56 : index
    %c0_89 = arith.constant 0 : index
    %153 = vector.load %arg14[%c56_88, %c0_89] : memref<72x256xf32, #tpu.memory_space<vmem>>, vector<8x256xf32>
    tpu.vector_store %arg14[%c56_88, %c0_89], %152 {strides = array<i32>} : memref<72x256xf32, #tpu.memory_space<vmem>>, vector<8x256xf32>,
    %c239_i32_90 = arith.constant 239 : i32
    %154 = tpu.dynamic_rotate %117 by %c239_i32_90 dim 1 : vector<8x256xf32>, i32 -> vector<8x256xf32>
    %155 = vector.extract_strided_slice %0 {offsets = [8, 0], sizes = [1, 256], strides = [1, 1]} : vector<9x256xf32> to vector<1x256xf32>
    %156 = vector.broadcast %155 : vector<1x256xf32> to vector<8x256xf32>
    %157 = arith.mulf %154, %156 : vector<8x256xf32>
    %c64_91 = arith.constant 64 : index
    %c0_92 = arith.constant 0 : index
    %158 = vector.load %arg14[%c64_91, %c0_92] : memref<72x256xf32, #tpu.memory_space<vmem>>, vector<8x256xf32>
    tpu.vector_store %arg14[%c64_91, %c0_92], %157 {strides = array<i32>} : memref<72x256xf32, #tpu.memory_space<vmem>>, vector<8x256xf32>,
    %c0_93 = arith.constant 0 : index
    %c0_94 = arith.constant 0 : index
    %159 = vector.load %arg14[%c0_93, %c0_94] : memref<72x256xf32, #tpu.memory_space<vmem>>, vector<72x256xf32>
    %160 = arith.truncf %159 : vector<72x256xf32> to vector<72x256xbf16>
    %c0_95 = arith.constant 0 : index
    %c0_96 = arith.constant 0 : index
    %161 = vector.load %arg5[%c0_95, %c0_96] : memref<4x72xbf16, #tpu.memory_space<vmem>>, vector<4x72xbf16>
    %cst_97 = arith.constant dense<0.000000e+00> : vector<4x256xf32>
    %162 = tpu.matmul %161, %160, %cst_97 {dimension_numbers = #tpu.dot_dimension_numbers<[1], [0], [0], [1], [0, 0, 1, 1], [], []>} : vector<4x72xbf16>, vector<72x256xbf16>, vector<4x256xf32> -> vector<4x256xf32>
    %c0_98 = arith.constant 0 : index
    %c0_99 = arith.constant 0 : index
    %163 = vector.load %arg6[%c0_98, %c0_99] : memref<4x1xf32, #tpu.memory_space<vmem>>, vector<4x1xf32>
    %164 = vector.broadcast %163 : vector<4x1xf32> to vector<4x256xf32>
    %165 = arith.addf %162, %164 : vector<4x256xf32>
    %166 = vector.extract_strided_slice %3 {offsets = [4, 0], sizes = [4, 256], strides = [1, 1]} : vector<8x256xf32> to vector<4x256xf32>
    %167 = tpu.concatenate %165, %166 in 0 : vector<4x256xf32>, vector<4x256xf32> -> vector<8x256xf32>
    %c17_i32_100 = arith.constant 17 : i32
    %168 = tpu.dynamic_rotate %167 by %c17_i32_100 dim 1 : vector<8x256xf32>, i32 -> vector<8x256xf32>
    %169 = vector.extract_strided_slice %0 {offsets = [0, 0], sizes = [1, 256], strides = [1, 1]} : vector<9x256xf32> to vector<1x256xf32>
    %170 = vector.broadcast %169 : vector<1x256xf32> to vector<8x256xf32>
    %171 = arith.mulf %168, %170 : vector<8x256xf32>
    %c0_101 = arith.constant 0 : index
    %c0_102 = arith.constant 0 : index
    %172 = vector.load %arg14[%c0_101, %c0_102] : memref<72x256xf32, #tpu.memory_space<vmem>>, vector<8x256xf32>
    tpu.vector_store %arg14[%c0_101, %c0_102], %171 {strides = array<i32>} : memref<72x256xf32, #tpu.memory_space<vmem>>, vector<8x256xf32>,
    %c16_i32_103 = arith.constant 16 : i32
    %173 = tpu.dynamic_rotate %167 by %c16_i32_103 dim 1 : vector<8x256xf32>, i32 -> vector<8x256xf32>
    %174 = vector.extract_strided_slice %0 {offsets = [1, 0], sizes = [1, 256], strides = [1, 1]} : vector<9x256xf32> to vector<1x256xf32>
    %175 = vector.broadcast %174 : vector<1x256xf32> to vector<8x256xf32>
    %176 = arith.mulf %173, %175 : vector<8x256xf32>
    %c8_104 = arith.constant 8 : index
    %c0_105 = arith.constant 0 : index
    %177 = vector.load %arg14[%c8_104, %c0_105] : memref<72x256xf32, #tpu.memory_space<vmem>>, vector<8x256xf32>
    tpu.vector_store %arg14[%c8_104, %c0_105], %176 {strides = array<i32>} : memref<72x256xf32, #tpu.memory_space<vmem>>, vector<8x256xf32>,
    %c15_i32_106 = arith.constant 15 : i32
    %178 = tpu.dynamic_rotate %167 by %c15_i32_106 dim 1 : vector<8x256xf32>, i32 -> vector<8x256xf32>
    %179 = vector.extract_strided_slice %0 {offsets = [2, 0], sizes = [1, 256], strides = [1, 1]} : vector<9x256xf32> to vector<1x256xf32>
    %180 = vector.broadcast %179 : vector<1x256xf32> to vector<8x256xf32>
    %181 = arith.mulf %178, %180 : vector<8x256xf32>
    %c16_107 = arith.constant 16 : index
    %c0_108 = arith.constant 0 : index
    %182 = vector.load %arg14[%c16_107, %c0_108] : memref<72x256xf32, #tpu.memory_space<vmem>>, vector<8x256xf32>
    tpu.vector_store %arg14[%c16_107, %c0_108], %181 {strides = array<i32>} : memref<72x256xf32, #tpu.memory_space<vmem>>, vector<8x256xf32>,
    %c1_i32_109 = arith.constant 1 : i32
    %183 = tpu.dynamic_rotate %167 by %c1_i32_109 dim 1 : vector<8x256xf32>, i32 -> vector<8x256xf32>
    %184 = vector.extract_strided_slice %0 {offsets = [3, 0], sizes = [1, 256], strides = [1, 1]} : vector<9x256xf32> to vector<1x256xf32>
    %185 = vector.broadcast %184 : vector<1x256xf32> to vector<8x256xf32>
    %186 = arith.mulf %183, %185 : vector<8x256xf32>
    %c24_110 = arith.constant 24 : index
    %c0_111 = arith.constant 0 : index
    %187 = vector.load %arg14[%c24_110, %c0_111] : memref<72x256xf32, #tpu.memory_space<vmem>>, vector<8x256xf32>
    tpu.vector_store %arg14[%c24_110, %c0_111], %186 {strides = array<i32>} : memref<72x256xf32, #tpu.memory_space<vmem>>, vector<8x256xf32>,
    %c32_112 = arith.constant 32 : index
    %c0_113 = arith.constant 0 : index
    %188 = vector.load %arg14[%c32_112, %c0_113] : memref<72x256xf32, #tpu.memory_space<vmem>>, vector<8x256xf32>
    tpu.vector_store %arg14[%c32_112, %c0_113], %167 {strides = array<i32>} : memref<72x256xf32, #tpu.memory_space<vmem>>, vector<8x256xf32>,
    %c255_i32_114 = arith.constant 255 : i32
    %189 = tpu.dynamic_rotate %167 by %c255_i32_114 dim 1 : vector<8x256xf32>, i32 -> vector<8x256xf32>
    %190 = vector.extract_strided_slice %0 {offsets = [5, 0], sizes = [1, 256], strides = [1, 1]} : vector<9x256xf32> to vector<1x256xf32>
    %191 = vector.broadcast %190 : vector<1x256xf32> to vector<8x256xf32>
    %192 = arith.mulf %189, %191 : vector<8x256xf32>
    %c40_115 = arith.constant 40 : index
    %c0_116 = arith.constant 0 : index
    %193 = vector.load %arg14[%c40_115, %c0_116] : memref<72x256xf32, #tpu.memory_space<vmem>>, vector<8x256xf32>
    tpu.vector_store %arg14[%c40_115, %c0_116], %192 {strides = array<i32>} : memref<72x256xf32, #tpu.memory_space<vmem>>, vector<8x256xf32>,
    %c241_i32_117 = arith.constant 241 : i32
    %194 = tpu.dynamic_rotate %167 by %c241_i32_117 dim 1 : vector<8x256xf32>, i32 -> vector<8x256xf32>
    %195 = vector.extract_strided_slice %0 {offsets = [6, 0], sizes = [1, 256], strides = [1, 1]} : vector<9x256xf32> to vector<1x256xf32>
    %196 = vector.broadcast %195 : vector<1x256xf32> to vector<8x256xf32>
    %197 = arith.mulf %194, %196 : vector<8x256xf32>
    %c48_118 = arith.constant 48 : index
    %c0_119 = arith.constant 0 : index
    %198 = vector.load %arg14[%c48_118, %c0_119] : memref<72x256xf32, #tpu.memory_space<vmem>>, vector<8x256xf32>
    tpu.vector_store %arg14[%c48_118, %c0_119], %197 {strides = array<i32>} : memref<72x256xf32, #tpu.memory_space<vmem>>, vector<8x256xf32>,
    %c240_i32_120 = arith.constant 240 : i32
    %199 = tpu.dynamic_rotate %167 by %c240_i32_120 dim 1 : vector<8x256xf32>, i32 -> vector<8x256xf32>
    %200 = vector.extract_strided_slice %0 {offsets = [7, 0], sizes = [1, 256], strides = [1, 1]} : vector<9x256xf32> to vector<1x256xf32>
    %201 = vector.broadcast %200 : vector<1x256xf32> to vector<8x256xf32>
    %202 = arith.mulf %199, %201 : vector<8x256xf32>
    %c56_121 = arith.constant 56 : index
    %c0_122 = arith.constant 0 : index
    %203 = vector.load %arg14[%c56_121, %c0_122] : memref<72x256xf32, #tpu.memory_space<vmem>>, vector<8x256xf32>
    tpu.vector_store %arg14[%c56_121, %c0_122], %202 {strides = array<i32>} : memref<72x256xf32, #tpu.memory_space<vmem>>, vector<8x256xf32>,
    %c239_i32_123 = arith.constant 239 : i32
    %204 = tpu.dynamic_rotate %167 by %c239_i32_123 dim 1 : vector<8x256xf32>, i32 -> vector<8x256xf32>
    %205 = vector.extract_strided_slice %0 {offsets = [8, 0], sizes = [1, 256], strides = [1, 1]} : vector<9x256xf32> to vector<1x256xf32>
    %206 = vector.broadcast %205 : vector<1x256xf32> to vector<8x256xf32>
    %207 = arith.mulf %204, %206 : vector<8x256xf32>
    %c64_124 = arith.constant 64 : index
    %c0_125 = arith.constant 0 : index
    %208 = vector.load %arg14[%c64_124, %c0_125] : memref<72x256xf32, #tpu.memory_space<vmem>>, vector<8x256xf32>
    tpu.vector_store %arg14[%c64_124, %c0_125], %207 {strides = array<i32>} : memref<72x256xf32, #tpu.memory_space<vmem>>, vector<8x256xf32>,
    %c0_126 = arith.constant 0 : index
    %c0_127 = arith.constant 0 : index
    %209 = vector.load %arg14[%c0_126, %c0_127] : memref<72x256xf32, #tpu.memory_space<vmem>>, vector<72x256xf32>
    %210 = arith.truncf %209 : vector<72x256xf32> to vector<72x256xbf16>
    %c0_128 = arith.constant 0 : index
    %c0_129 = arith.constant 0 : index
    %211 = vector.load %arg7[%c0_128, %c0_129] : memref<8x72xbf16, #tpu.memory_space<vmem>>, vector<8x72xbf16>
    %cst_130 = arith.constant dense<0.000000e+00> : vector<8x256xf32>
    %212 = tpu.matmul %211, %210, %cst_130 {dimension_numbers = #tpu.dot_dimension_numbers<[1], [0], [0], [1], [0, 0, 1, 1], [], []>} : vector<8x72xbf16>, vector<72x256xbf16>, vector<8x256xf32> -> vector<8x256xf32>
    %c0_131 = arith.constant 0 : index
    %c0_132 = arith.constant 0 : index
    %213 = vector.load %arg8[%c0_131, %c0_132] : memref<8x1xf32, #tpu.memory_space<vmem>>, vector<8x1xf32>
    %214 = vector.broadcast %213 : vector<8x1xf32> to vector<8x256xf32>
    %215 = arith.addf %212, %214 : vector<8x256xf32>
    %c1_133 = arith.constant 1 : index
    %c0_134 = arith.constant 0 : index
    %c0_135 = arith.constant 0 : index
    %216 = vector.load %arg15[%c1_133, %c0_134, %c0_135] : memref<2x8x256xf32, #tpu.memory_space<vmem>>, vector<1x8x256xf32>
    %217 = vector.shape_cast %216 : vector<1x8x256xf32> to vector<8x256xf32>
    %218 = vector.shape_cast %215 : vector<8x256xf32> to vector<1x8x256xf32>
    tpu.vector_store %arg15[%c1_133, %c0_134, %c0_135], %218 {strides = array<i32>} : memref<2x8x256xf32, #tpu.memory_space<vmem>>, vector<1x8x256xf32>,
    %cst_136 = arith.constant dense<0.000000e+00> : vector<8xf32>
    %219 = vector.multi_reduction <add>, %215, %cst_136 [1] : vector<8x256xf32> to vector<8xf32>
    %220 = vector.shape_cast %219 : vector<8xf32> to vector<8x1xf32>
    %221 = arith.addf %111, %220 : vector<8x1xf32>
    %222 = arith.mulf %215, %215 : vector<8x256xf32>
    %cst_137 = arith.constant dense<0.000000e+00> : vector<8xf32>
    %223 = vector.multi_reduction <add>, %222, %cst_137 [1] : vector<8x256xf32> to vector<8xf32>
    %224 = vector.shape_cast %223 : vector<8xf32> to vector<8x1xf32>
    %225 = arith.addf %115, %224 : vector<8x1xf32>
    %cst_138 = arith.constant 5.120000e+02 : f32
    %226 = vector.broadcast %cst_138 : f32 to vector<8x1xf32>
    %227 = arith.divf %221, %226 : vector<8x1xf32>
    %cst_139 = arith.constant 5.120000e+02 : f32
    %228 = vector.broadcast %cst_139 : f32 to vector<8x1xf32>
    %229 = arith.divf %225, %228 : vector<8x1xf32>
    %230 = arith.mulf %227, %227 : vector<8x1xf32>
    %231 = arith.subf %229, %230 : vector<8x1xf32>
    %cst_140 = arith.constant 0.000000e+00 : f32
    %232 = vector.broadcast %cst_140 : f32 to vector<8x1xf32>
    %233 = arith.maximumf %231, %232 : vector<8x1xf32>
    %c0_141 = arith.constant 0 : index
    %c0_142 = arith.constant 0 : index
    %234 = vector.load %arg11[%c0_141, %c0_142] : memref<8x1xf32, #tpu.memory_space<vmem>>, vector<8x1xf32>
    %cst_143 = arith.constant 9.99999974E-6 : f32
    %235 = vector.broadcast %cst_143 : f32 to vector<8x1xf32>
    %236 = arith.addf %233, %235 : vector<8x1xf32>
    %237 = math.rsqrt %236 : vector<8x1xf32>
    %238 = arith.mulf %234, %237 : vector<8x1xf32>
    %c0_144 = arith.constant 0 : index
    %c0_145 = arith.constant 0 : index
    %239 = vector.load %arg12[%c0_144, %c0_145] : memref<8x1xf32, #tpu.memory_space<vmem>>, vector<8x1xf32>
    %240 = arith.mulf %227, %238 : vector<8x1xf32>
    %241 = arith.subf %239, %240 : vector<8x1xf32>
    %cst_146 = arith.constant 0.000000e+00 : f32
    %242 = vector.broadcast %cst_146 : f32 to vector<8x1xf32>
    %cst_147 = arith.constant 0.000000e+00 : f32
    %243 = vector.broadcast %cst_147 : f32 to vector<8x1xf32>
    %c0_148 = arith.constant 0 : index
    %c0_149 = arith.constant 0 : index
    %c0_150 = arith.constant 0 : index
    %244 = vector.load %arg15[%c0_148, %c0_149, %c0_150] : memref<2x8x256xf32, #tpu.memory_space<vmem>>, vector<1x8x256xf32>
    %245 = vector.shape_cast %244 : vector<1x8x256xf32> to vector<8x256xf32>
    %246 = vector.broadcast %238 : vector<8x1xf32> to vector<8x256xf32>
    %247 = arith.mulf %245, %246 : vector<8x256xf32>
    %248 = vector.broadcast %241 : vector<8x1xf32> to vector<8x256xf32>
    %249 = arith.addf %247, %248 : vector<8x256xf32>
    %cst_151 = arith.constant 0.000000e+00 : f32
    %250 = vector.broadcast %cst_151 : f32 to vector<8x256xf32>
    %251 = arith.maximumf %249, %250 : vector<8x256xf32>
    %c17_i32_152 = arith.constant 17 : i32
    %252 = tpu.dynamic_rotate %251 by %c17_i32_152 dim 1 : vector<8x256xf32>, i32 -> vector<8x256xf32>
    %253 = vector.extract_strided_slice %0 {offsets = [0, 0], sizes = [1, 256], strides = [1, 1]} : vector<9x256xf32> to vector<1x256xf32>
    %254 = vector.broadcast %253 : vector<1x256xf32> to vector<8x256xf32>
    %255 = arith.mulf %252, %254 : vector<8x256xf32>
    %c0_153 = arith.constant 0 : index
    %c0_154 = arith.constant 0 : index
    %256 = vector.load %arg14[%c0_153, %c0_154] : memref<72x256xf32, #tpu.memory_space<vmem>>, vector<8x256xf32>
    tpu.vector_store %arg14[%c0_153, %c0_154], %255 {strides = array<i32>} : memref<72x256xf32, #tpu.memory_space<vmem>>, vector<8x256xf32>,
    %c16_i32_155 = arith.constant 16 : i32
    %257 = tpu.dynamic_rotate %251 by %c16_i32_155 dim 1 : vector<8x256xf32>, i32 -> vector<8x256xf32>
    %258 = vector.extract_strided_slice %0 {offsets = [1, 0], sizes = [1, 256], strides = [1, 1]} : vector<9x256xf32> to vector<1x256xf32>
    %259 = vector.broadcast %258 : vector<1x256xf32> to vector<8x256xf32>
    %260 = arith.mulf %257, %259 : vector<8x256xf32>
    %c8_156 = arith.constant 8 : index
    %c0_157 = arith.constant 0 : index
    %261 = vector.load %arg14[%c8_156, %c0_157] : memref<72x256xf32, #tpu.memory_space<vmem>>, vector<8x256xf32>
    tpu.vector_store %arg14[%c8_156, %c0_157], %260 {strides = array<i32>} : memref<72x256xf32, #tpu.memory_space<vmem>>, vector<8x256xf32>,
    %c15_i32_158 = arith.constant 15 : i32
    %262 = tpu.dynamic_rotate %251 by %c15_i32_158 dim 1 : vector<8x256xf32>, i32 -> vector<8x256xf32>
    %263 = vector.extract_strided_slice %0 {offsets = [2, 0], sizes = [1, 256], strides = [1, 1]} : vector<9x256xf32> to vector<1x256xf32>
    %264 = vector.broadcast %263 : vector<1x256xf32> to vector<8x256xf32>
    %265 = arith.mulf %262, %264 : vector<8x256xf32>
    %c16_159 = arith.constant 16 : index
    %c0_160 = arith.constant 0 : index
    %266 = vector.load %arg14[%c16_159, %c0_160] : memref<72x256xf32, #tpu.memory_space<vmem>>, vector<8x256xf32>
    tpu.vector_store %arg14[%c16_159, %c0_160], %265 {strides = array<i32>} : memref<72x256xf32, #tpu.memory_space<vmem>>, vector<8x256xf32>,
    %c1_i32_161 = arith.constant 1 : i32
    %267 = tpu.dynamic_rotate %251 by %c1_i32_161 dim 1 : vector<8x256xf32>, i32 -> vector<8x256xf32>
    %268 = vector.extract_strided_slice %0 {offsets = [3, 0], sizes = [1, 256], strides = [1, 1]} : vector<9x256xf32> to vector<1x256xf32>
    %269 = vector.broadcast %268 : vector<1x256xf32> to vector<8x256xf32>
    %270 = arith.mulf %267, %269 : vector<8x256xf32>
    %c24_162 = arith.constant 24 : index
    %c0_163 = arith.constant 0 : index
    %271 = vector.load %arg14[%c24_162, %c0_163] : memref<72x256xf32, #tpu.memory_space<vmem>>, vector<8x256xf32>
    tpu.vector_store %arg14[%c24_162, %c0_163], %270 {strides = array<i32>} : memref<72x256xf32, #tpu.memory_space<vmem>>, vector<8x256xf32>,
    %c32_164 = arith.constant 32 : index
    %c0_165 = arith.constant 0 : index
    %272 = vector.load %arg14[%c32_164, %c0_165] : memref<72x256xf32, #tpu.memory_space<vmem>>, vector<8x256xf32>
    tpu.vector_store %arg14[%c32_164, %c0_165], %251 {strides = array<i32>} : memref<72x256xf32, #tpu.memory_space<vmem>>, vector<8x256xf32>,
    %c255_i32_166 = arith.constant 255 : i32
    %273 = tpu.dynamic_rotate %251 by %c255_i32_166 dim 1 : vector<8x256xf32>, i32 -> vector<8x256xf32>
    %274 = vector.extract_strided_slice %0 {offsets = [5, 0], sizes = [1, 256], strides = [1, 1]} : vector<9x256xf32> to vector<1x256xf32>
    %275 = vector.broadcast %274 : vector<1x256xf32> to vector<8x256xf32>
    %276 = arith.mulf %273, %275 : vector<8x256xf32>
    %c40_167 = arith.constant 40 : index
    %c0_168 = arith.constant 0 : index
    %277 = vector.load %arg14[%c40_167, %c0_168] : memref<72x256xf32, #tpu.memory_space<vmem>>, vector<8x256xf32>
    tpu.vector_store %arg14[%c40_167, %c0_168], %276 {strides = array<i32>} : memref<72x256xf32, #tpu.memory_space<vmem>>, vector<8x256xf32>,
    %c241_i32_169 = arith.constant 241 : i32
    %278 = tpu.dynamic_rotate %251 by %c241_i32_169 dim 1 : vector<8x256xf32>, i32 -> vector<8x256xf32>
    %279 = vector.extract_strided_slice %0 {offsets = [6, 0], sizes = [1, 256], strides = [1, 1]} : vector<9x256xf32> to vector<1x256xf32>
    %280 = vector.broadcast %279 : vector<1x256xf32> to vector<8x256xf32>
    %281 = arith.mulf %278, %280 : vector<8x256xf32>
    %c48_170 = arith.constant 48 : index
    %c0_171 = arith.constant 0 : index
    %282 = vector.load %arg14[%c48_170, %c0_171] : memref<72x256xf32, #tpu.memory_space<vmem>>, vector<8x256xf32>
    tpu.vector_store %arg14[%c48_170, %c0_171], %281 {strides = array<i32>} : memref<72x256xf32, #tpu.memory_space<vmem>>, vector<8x256xf32>,
    %c240_i32_172 = arith.constant 240 : i32
    %283 = tpu.dynamic_rotate %251 by %c240_i32_172 dim 1 : vector<8x256xf32>, i32 -> vector<8x256xf32>
    %284 = vector.extract_strided_slice %0 {offsets = [7, 0], sizes = [1, 256], strides = [1, 1]} : vector<9x256xf32> to vector<1x256xf32>
    %285 = vector.broadcast %284 : vector<1x256xf32> to vector<8x256xf32>
    %286 = arith.mulf %283, %285 : vector<8x256xf32>
    %c56_173 = arith.constant 56 : index
    %c0_174 = arith.constant 0 : index
    %287 = vector.load %arg14[%c56_173, %c0_174] : memref<72x256xf32, #tpu.memory_space<vmem>>, vector<8x256xf32>
    tpu.vector_store %arg14[%c56_173, %c0_174], %286 {strides = array<i32>} : memref<72x256xf32, #tpu.memory_space<vmem>>, vector<8x256xf32>,
    %c239_i32_175 = arith.constant 239 : i32
    %288 = tpu.dynamic_rotate %251 by %c239_i32_175 dim 1 : vector<8x256xf32>, i32 -> vector<8x256xf32>
    %289 = vector.extract_strided_slice %0 {offsets = [8, 0], sizes = [1, 256], strides = [1, 1]} : vector<9x256xf32> to vector<1x256xf32>
    %290 = vector.broadcast %289 : vector<1x256xf32> to vector<8x256xf32>
    %291 = arith.mulf %288, %290 : vector<8x256xf32>
    %c64_176 = arith.constant 64 : index
    %c0_177 = arith.constant 0 : index
    %292 = vector.load %arg14[%c64_176, %c0_177] : memref<72x256xf32, #tpu.memory_space<vmem>>, vector<8x256xf32>
    tpu.vector_store %arg14[%c64_176, %c0_177], %291 {strides = array<i32>} : memref<72x256xf32, #tpu.memory_space<vmem>>, vector<8x256xf32>,
    %c0_178 = arith.constant 0 : index
    %c0_179 = arith.constant 0 : index
    %293 = vector.load %arg14[%c0_178, %c0_179] : memref<72x256xf32, #tpu.memory_space<vmem>>, vector<72x256xf32>
    %294 = arith.truncf %293 : vector<72x256xf32> to vector<72x256xbf16>
    %c0_180 = arith.constant 0 : index
    %c0_181 = arith.constant 0 : index
    %295 = vector.load %arg9[%c0_180, %c0_181] : memref<8x72xbf16, #tpu.memory_space<vmem>>, vector<8x72xbf16>
    %cst_182 = arith.constant dense<0.000000e+00> : vector<8x256xf32>
    %296 = tpu.matmul %295, %294, %cst_182 {dimension_numbers = #tpu.dot_dimension_numbers<[1], [0], [0], [1], [0, 0, 1, 1], [], []>} : vector<8x72xbf16>, vector<72x256xbf16>, vector<8x256xf32> -> vector<8x256xf32>
    %c0_183 = arith.constant 0 : index
    %c0_184 = arith.constant 0 : index
    %297 = vector.load %arg10[%c0_183, %c0_184] : memref<8x1xf32, #tpu.memory_space<vmem>>, vector<8x1xf32>
    %298 = vector.broadcast %297 : vector<8x1xf32> to vector<8x256xf32>
    %299 = arith.addf %296, %298 : vector<8x256xf32>
    %c0_185 = arith.constant 0 : index
    %c0_186 = arith.constant 0 : index
    %c0_187 = arith.constant 0 : index
    %300 = vector.load %arg13[%c0_185, %c0_186, %c0_187] : memref<2x8x256xf32, #tpu.memory_space<vmem>>, vector<1x8x256xf32>
    %301 = vector.shape_cast %300 : vector<1x8x256xf32> to vector<8x256xf32>
    %302 = vector.shape_cast %299 : vector<8x256xf32> to vector<1x8x256xf32>
    tpu.vector_store %arg13[%c0_185, %c0_186, %c0_187], %302 {strides = array<i32>} : memref<2x8x256xf32, #tpu.memory_space<vmem>>, vector<1x8x256xf32>,
    %cst_188 = arith.constant dense<0.000000e+00> : vector<8xf32>
    %303 = vector.multi_reduction <add>, %299, %cst_188 [1] : vector<8x256xf32> to vector<8xf32>
    %304 = vector.shape_cast %303 : vector<8xf32> to vector<8x1xf32>
    %305 = arith.addf %242, %304 : vector<8x1xf32>
    %306 = arith.mulf %299, %299 : vector<8x256xf32>
    %cst_189 = arith.constant dense<0.000000e+00> : vector<8xf32>
    %307 = vector.multi_reduction <add>, %306, %cst_189 [1] : vector<8x256xf32> to vector<8xf32>
    %308 = vector.shape_cast %307 : vector<8xf32> to vector<8x1xf32>
    %309 = arith.addf %243, %308 : vector<8x1xf32>
    %c1_190 = arith.constant 1 : index
    %c0_191 = arith.constant 0 : index
    %c0_192 = arith.constant 0 : index
    %310 = vector.load %arg15[%c1_190, %c0_191, %c0_192] : memref<2x8x256xf32, #tpu.memory_space<vmem>>, vector<1x8x256xf32>
    %311 = vector.shape_cast %310 : vector<1x8x256xf32> to vector<8x256xf32>
    %312 = vector.broadcast %238 : vector<8x1xf32> to vector<8x256xf32>
    %313 = arith.mulf %311, %312 : vector<8x256xf32>
    %314 = vector.broadcast %241 : vector<8x1xf32> to vector<8x256xf32>
    %315 = arith.addf %313, %314 : vector<8x256xf32>
    %cst_193 = arith.constant 0.000000e+00 : f32
    %316 = vector.broadcast %cst_193 : f32 to vector<8x256xf32>
    %317 = arith.maximumf %315, %316 : vector<8x256xf32>
    %c17_i32_194 = arith.constant 17 : i32
    %318 = tpu.dynamic_rotate %317 by %c17_i32_194 dim 1 : vector<8x256xf32>, i32 -> vector<8x256xf32>
    %319 = vector.extract_strided_slice %0 {offsets = [0, 0], sizes = [1, 256], strides = [1, 1]} : vector<9x256xf32> to vector<1x256xf32>
    %320 = vector.broadcast %319 : vector<1x256xf32> to vector<8x256xf32>
    %321 = arith.mulf %318, %320 : vector<8x256xf32>
    %c0_195 = arith.constant 0 : index
    %c0_196 = arith.constant 0 : index
    %322 = vector.load %arg14[%c0_195, %c0_196] : memref<72x256xf32, #tpu.memory_space<vmem>>, vector<8x256xf32>
    tpu.vector_store %arg14[%c0_195, %c0_196], %321 {strides = array<i32>} : memref<72x256xf32, #tpu.memory_space<vmem>>, vector<8x256xf32>,
    %c16_i32_197 = arith.constant 16 : i32
    %323 = tpu.dynamic_rotate %317 by %c16_i32_197 dim 1 : vector<8x256xf32>, i32 -> vector<8x256xf32>
    %324 = vector.extract_strided_slice %0 {offsets = [1, 0], sizes = [1, 256], strides = [1, 1]} : vector<9x256xf32> to vector<1x256xf32>
    %325 = vector.broadcast %324 : vector<1x256xf32> to vector<8x256xf32>
    %326 = arith.mulf %323, %325 : vector<8x256xf32>
    %c8_198 = arith.constant 8 : index
    %c0_199 = arith.constant 0 : index
    %327 = vector.load %arg14[%c8_198, %c0_199] : memref<72x256xf32, #tpu.memory_space<vmem>>, vector<8x256xf32>
    tpu.vector_store %arg14[%c8_198, %c0_199], %326 {strides = array<i32>} : memref<72x256xf32, #tpu.memory_space<vmem>>, vector<8x256xf32>,
    %c15_i32_200 = arith.constant 15 : i32
    %328 = tpu.dynamic_rotate %317 by %c15_i32_200 dim 1 : vector<8x256xf32>, i32 -> vector<8x256xf32>
    %329 = vector.extract_strided_slice %0 {offsets = [2, 0], sizes = [1, 256], strides = [1, 1]} : vector<9x256xf32> to vector<1x256xf32>
    %330 = vector.broadcast %329 : vector<1x256xf32> to vector<8x256xf32>
    %331 = arith.mulf %328, %330 : vector<8x256xf32>
    %c16_201 = arith.constant 16 : index
    %c0_202 = arith.constant 0 : index
    %332 = vector.load %arg14[%c16_201, %c0_202] : memref<72x256xf32, #tpu.memory_space<vmem>>, vector<8x256xf32>
    tpu.vector_store %arg14[%c16_201, %c0_202], %331 {strides = array<i32>} : memref<72x256xf32, #tpu.memory_space<vmem>>, vector<8x256xf32>,
    %c1_i32_203 = arith.constant 1 : i32
    %333 = tpu.dynamic_rotate %317 by %c1_i32_203 dim 1 : vector<8x256xf32>, i32 -> vector<8x256xf32>
    %334 = vector.extract_strided_slice %0 {offsets = [3, 0], sizes = [1, 256], strides = [1, 1]} : vector<9x256xf32> to vector<1x256xf32>
    %335 = vector.broadcast %334 : vector<1x256xf32> to vector<8x256xf32>
    %336 = arith.mulf %333, %335 : vector<8x256xf32>
    %c24_204 = arith.constant 24 : index
    %c0_205 = arith.constant 0 : index
    %337 = vector.load %arg14[%c24_204, %c0_205] : memref<72x256xf32, #tpu.memory_space<vmem>>, vector<8x256xf32>
    tpu.vector_store %arg14[%c24_204, %c0_205], %336 {strides = array<i32>} : memref<72x256xf32, #tpu.memory_space<vmem>>, vector<8x256xf32>,
    %c32_206 = arith.constant 32 : index
    %c0_207 = arith.constant 0 : index
    %338 = vector.load %arg14[%c32_206, %c0_207] : memref<72x256xf32, #tpu.memory_space<vmem>>, vector<8x256xf32>
    tpu.vector_store %arg14[%c32_206, %c0_207], %317 {strides = array<i32>} : memref<72x256xf32, #tpu.memory_space<vmem>>, vector<8x256xf32>,
    %c255_i32_208 = arith.constant 255 : i32
    %339 = tpu.dynamic_rotate %317 by %c255_i32_208 dim 1 : vector<8x256xf32>, i32 -> vector<8x256xf32>
    %340 = vector.extract_strided_slice %0 {offsets = [5, 0], sizes = [1, 256], strides = [1, 1]} : vector<9x256xf32> to vector<1x256xf32>
    %341 = vector.broadcast %340 : vector<1x256xf32> to vector<8x256xf32>
    %342 = arith.mulf %339, %341 : vector<8x256xf32>
    %c40_209 = arith.constant 40 : index
    %c0_210 = arith.constant 0 : index
    %343 = vector.load %arg14[%c40_209, %c0_210] : memref<72x256xf32, #tpu.memory_space<vmem>>, vector<8x256xf32>
    tpu.vector_store %arg14[%c40_209, %c0_210], %342 {strides = array<i32>} : memref<72x256xf32, #tpu.memory_space<vmem>>, vector<8x256xf32>,
    %c241_i32_211 = arith.constant 241 : i32
    %344 = tpu.dynamic_rotate %317 by %c241_i32_211 dim 1 : vector<8x256xf32>, i32 -> vector<8x256xf32>
    %345 = vector.extract_strided_slice %0 {offsets = [6, 0], sizes = [1, 256], strides = [1, 1]} : vector<9x256xf32> to vector<1x256xf32>
    %346 = vector.broadcast %345 : vector<1x256xf32> to vector<8x256xf32>
    %347 = arith.mulf %344, %346 : vector<8x256xf32>
    %c48_212 = arith.constant 48 : index
    %c0_213 = arith.constant 0 : index
    %348 = vector.load %arg14[%c48_212, %c0_213] : memref<72x256xf32, #tpu.memory_space<vmem>>, vector<8x256xf32>
    tpu.vector_store %arg14[%c48_212, %c0_213], %347 {strides = array<i32>} : memref<72x256xf32, #tpu.memory_space<vmem>>, vector<8x256xf32>,
    %c240_i32_214 = arith.constant 240 : i32
    %349 = tpu.dynamic_rotate %317 by %c240_i32_214 dim 1 : vector<8x256xf32>, i32 -> vector<8x256xf32>
    %350 = vector.extract_strided_slice %0 {offsets = [7, 0], sizes = [1, 256], strides = [1, 1]} : vector<9x256xf32> to vector<1x256xf32>
    %351 = vector.broadcast %350 : vector<1x256xf32> to vector<8x256xf32>
    %352 = arith.mulf %349, %351 : vector<8x256xf32>
    %c56_215 = arith.constant 56 : index
    %c0_216 = arith.constant 0 : index
    %353 = vector.load %arg14[%c56_215, %c0_216] : memref<72x256xf32, #tpu.memory_space<vmem>>, vector<8x256xf32>
    tpu.vector_store %arg14[%c56_215, %c0_216], %352 {strides = array<i32>} : memref<72x256xf32, #tpu.memory_space<vmem>>, vector<8x256xf32>,
    %c239_i32_217 = arith.constant 239 : i32
    %354 = tpu.dynamic_rotate %317 by %c239_i32_217 dim 1 : vector<8x256xf32>, i32 -> vector<8x256xf32>
    %355 = vector.extract_strided_slice %0 {offsets = [8, 0], sizes = [1, 256], strides = [1, 1]} : vector<9x256xf32> to vector<1x256xf32>
    %356 = vector.broadcast %355 : vector<1x256xf32> to vector<8x256xf32>
    %357 = arith.mulf %354, %356 : vector<8x256xf32>
    %c64_218 = arith.constant 64 : index
    %c0_219 = arith.constant 0 : index
    %358 = vector.load %arg14[%c64_218, %c0_219] : memref<72x256xf32, #tpu.memory_space<vmem>>, vector<8x256xf32>
    tpu.vector_store %arg14[%c64_218, %c0_219], %357 {strides = array<i32>} : memref<72x256xf32, #tpu.memory_space<vmem>>, vector<8x256xf32>,
    %c0_220 = arith.constant 0 : index
    %c0_221 = arith.constant 0 : index
    %359 = vector.load %arg14[%c0_220, %c0_221] : memref<72x256xf32, #tpu.memory_space<vmem>>, vector<72x256xf32>
    %360 = arith.truncf %359 : vector<72x256xf32> to vector<72x256xbf16>
    %c0_222 = arith.constant 0 : index
    %c0_223 = arith.constant 0 : index
    %361 = vector.load %arg9[%c0_222, %c0_223] : memref<8x72xbf16, #tpu.memory_space<vmem>>, vector<8x72xbf16>
    %cst_224 = arith.constant dense<0.000000e+00> : vector<8x256xf32>
    %362 = tpu.matmul %361, %360, %cst_224 {dimension_numbers = #tpu.dot_dimension_numbers<[1], [0], [0], [1], [0, 0, 1, 1], [], []>} : vector<8x72xbf16>, vector<72x256xbf16>, vector<8x256xf32> -> vector<8x256xf32>
    %c0_225 = arith.constant 0 : index
    %c0_226 = arith.constant 0 : index
    %363 = vector.load %arg10[%c0_225, %c0_226] : memref<8x1xf32, #tpu.memory_space<vmem>>, vector<8x1xf32>
    %364 = vector.broadcast %363 : vector<8x1xf32> to vector<8x256xf32>
    %365 = arith.addf %362, %364 : vector<8x256xf32>
    %c1_227 = arith.constant 1 : index
    %c0_228 = arith.constant 0 : index
    %c0_229 = arith.constant 0 : index
    %366 = vector.load %arg13[%c1_227, %c0_228, %c0_229] : memref<2x8x256xf32, #tpu.memory_space<vmem>>, vector<1x8x256xf32>
    %367 = vector.shape_cast %366 : vector<1x8x256xf32> to vector<8x256xf32>
    %368 = vector.shape_cast %365 : vector<8x256xf32> to vector<1x8x256xf32>
    tpu.vector_store %arg13[%c1_227, %c0_228, %c0_229], %368 {strides = array<i32>} : memref<2x8x256xf32, #tpu.memory_space<vmem>>, vector<1x8x256xf32>,
    %cst_230 = arith.constant dense<0.000000e+00> : vector<8xf32>
    %369 = vector.multi_reduction <add>, %365, %cst_230 [1] : vector<8x256xf32> to vector<8xf32>
    %370 = vector.shape_cast %369 : vector<8xf32> to vector<8x1xf32>
    %371 = arith.addf %305, %370 : vector<8x1xf32>
    %372 = arith.mulf %365, %365 : vector<8x256xf32>
    %cst_231 = arith.constant dense<0.000000e+00> : vector<8xf32>
    %373 = vector.multi_reduction <add>, %372, %cst_231 [1] : vector<8x256xf32> to vector<8xf32>
    %374 = vector.shape_cast %373 : vector<8xf32> to vector<8x1xf32>
    %375 = arith.addf %309, %374 : vector<8x1xf32>
    %cst_232 = arith.constant 5.120000e+02 : f32
    %376 = vector.broadcast %cst_232 : f32 to vector<8x1xf32>
    %377 = arith.divf %371, %376 : vector<8x1xf32>
    %cst_233 = arith.constant 5.120000e+02 : f32
    %378 = vector.broadcast %cst_233 : f32 to vector<8x1xf32>
    %379 = arith.divf %375, %378 : vector<8x1xf32>
    %380 = arith.mulf %377, %377 : vector<8x1xf32>
    %381 = arith.subf %379, %380 : vector<8x1xf32>
    %cst_234 = arith.constant 0.000000e+00 : f32
    %382 = vector.broadcast %cst_234 : f32 to vector<8x1xf32>
    %383 = arith.maximumf %381, %382 : vector<8x1xf32>
    %c0_235 = arith.constant 0 : index
    %c0_236 = arith.constant 0 : index
    %384 = vector.load %arg11[%c0_235, %c0_236] : memref<8x1xf32, #tpu.memory_space<vmem>>, vector<8x1xf32>
    %cst_237 = arith.constant 9.99999974E-6 : f32
    %385 = vector.broadcast %cst_237 : f32 to vector<8x1xf32>
    %386 = arith.addf %383, %385 : vector<8x1xf32>
    %387 = math.rsqrt %386 : vector<8x1xf32>
    %388 = arith.mulf %384, %387 : vector<8x1xf32>
    %c0_238 = arith.constant 0 : index
    %c0_239 = arith.constant 0 : index
    %389 = vector.load %arg12[%c0_238, %c0_239] : memref<8x1xf32, #tpu.memory_space<vmem>>, vector<8x1xf32>
    %390 = arith.mulf %377, %388 : vector<8x1xf32>
    %391 = arith.subf %389, %390 : vector<8x1xf32>
    %c0_240 = arith.constant 0 : index
    %c0_241 = arith.constant 0 : index
    %c0_242 = arith.constant 0 : index
    %392 = vector.load %arg13[%c0_240, %c0_241, %c0_242] : memref<2x8x256xf32, #tpu.memory_space<vmem>>, vector<1x8x256xf32>
    %393 = vector.shape_cast %392 : vector<1x8x256xf32> to vector<8x256xf32>
    %394 = vector.broadcast %388 : vector<8x1xf32> to vector<8x256xf32>
    %395 = arith.mulf %393, %394 : vector<8x256xf32>
    %396 = vector.broadcast %391 : vector<8x1xf32> to vector<8x256xf32>
    %397 = arith.addf %395, %396 : vector<8x256xf32>
    %cst_243 = arith.constant 0.000000e+00 : f32
    %398 = vector.broadcast %cst_243 : f32 to vector<8x256xf32>
    %399 = arith.maximumf %397, %398 : vector<8x256xf32>
    %c0_244 = arith.constant 0 : index
    %c0_245 = arith.constant 0 : index
    %c0_246 = arith.constant 0 : index
    %400 = vector.load %arg13[%c0_244, %c0_245, %c0_246] : memref<2x8x256xf32, #tpu.memory_space<vmem>>, vector<1x8x256xf32>
    %401 = vector.shape_cast %400 : vector<1x8x256xf32> to vector<8x256xf32>
    %402 = vector.shape_cast %399 : vector<8x256xf32> to vector<1x8x256xf32>
    tpu.vector_store %arg13[%c0_244, %c0_245, %c0_246], %402 {strides = array<i32>} : memref<2x8x256xf32, #tpu.memory_space<vmem>>, vector<1x8x256xf32>,
    %c1_247 = arith.constant 1 : index
    %c0_248 = arith.constant 0 : index
    %c0_249 = arith.constant 0 : index
    %403 = vector.load %arg13[%c1_247, %c0_248, %c0_249] : memref<2x8x256xf32, #tpu.memory_space<vmem>>, vector<1x8x256xf32>
    %404 = vector.shape_cast %403 : vector<1x8x256xf32> to vector<8x256xf32>
    %405 = vector.broadcast %388 : vector<8x1xf32> to vector<8x256xf32>
    %406 = arith.mulf %404, %405 : vector<8x256xf32>
    %407 = vector.broadcast %391 : vector<8x1xf32> to vector<8x256xf32>
    %408 = arith.addf %406, %407 : vector<8x256xf32>
    %cst_250 = arith.constant 0.000000e+00 : f32
    %409 = vector.broadcast %cst_250 : f32 to vector<8x256xf32>
    %410 = arith.maximumf %408, %409 : vector<8x256xf32>
    %c1_251 = arith.constant 1 : index
    %c0_252 = arith.constant 0 : index
    %c0_253 = arith.constant 0 : index
    %411 = vector.load %arg13[%c1_251, %c0_252, %c0_253] : memref<2x8x256xf32, #tpu.memory_space<vmem>>, vector<1x8x256xf32>
    %412 = vector.shape_cast %411 : vector<1x8x256xf32> to vector<8x256xf32>
    %413 = vector.shape_cast %410 : vector<8x256xf32> to vector<1x8x256xf32>
    tpu.vector_store %arg13[%c1_251, %c0_252, %c0_253], %413 {strides = array<i32>} : memref<2x8x256xf32, #tpu.memory_space<vmem>>, vector<1x8x256xf32>,
    return
  }
  func.func @transform_0(%arg0: i32) -> (i32, i32) {
    %c0_i32 = arith.constant 0 : i32
    %c0_i32_0 = arith.constant 0 : i32
    %c0_i32_1 = arith.constant 0 : i32
    return %c0_i32, %c0_i32_0 : i32, i32
  }
  func.func @transform_1(%arg0: i32) -> (i32, i32) {
    %c0_i32 = arith.constant 0 : i32
    %c0_i32_0 = arith.constant 0 : i32
    %c0_i32_1 = arith.constant 0 : i32
    return %c0_i32, %c0_i32_0 : i32, i32
  }
  func.func @transform_2(%arg0: i32) -> (i32, i32) {
    %c0_i32 = arith.constant 0 : i32
    %c0_i32_0 = arith.constant 0 : i32
    %c0_i32_1 = arith.constant 0 : i32
    return %c0_i32, %c0_i32_0 : i32, i32
  }
  func.func @transform_3(%arg0: i32) -> (i32, i32, i32) {
    %c0_i32 = arith.constant 0 : i32
    %c0_i32_0 = arith.constant 0 : i32
    %c0_i32_1 = arith.constant 0 : i32
    %c0_i32_2 = arith.constant 0 : i32
    return %c0_i32, %c0_i32_0, %c0_i32_1 : i32, i32, i32
  }
  func.func @transform_4(%arg0: i32) -> (i32, i32) {
    %c0_i32 = arith.constant 0 : i32
    %c0_i32_0 = arith.constant 0 : i32
    %c0_i32_1 = arith.constant 0 : i32
    return %c0_i32, %c0_i32_0 : i32, i32
  }
  func.func @transform_5(%arg0: i32) -> (i32, i32) {
    %c0_i32 = arith.constant 0 : i32
    %c0_i32_0 = arith.constant 0 : i32
    %c0_i32_1 = arith.constant 0 : i32
    return %c0_i32, %c0_i32_0 : i32, i32
  }
  func.func @transform_6(%arg0: i32) -> (i32, i32) {
    %c0_i32 = arith.constant 0 : i32
    %c0_i32_0 = arith.constant 0 : i32
    %c0_i32_1 = arith.constant 0 : i32
    return %c0_i32, %c0_i32_0 : i32, i32
  }
  func.func @transform_7(%arg0: i32) -> (i32, i32) {
    %c0_i32 = arith.constant 0 : i32
    %c0_i32_0 = arith.constant 0 : i32
    %c0_i32_1 = arith.constant 0 : i32
    return %c0_i32, %c0_i32_0 : i32, i32
  }
  func.func @transform_8(%arg0: i32) -> (i32, i32) {
    %c0_i32 = arith.constant 0 : i32
    %c0_i32_0 = arith.constant 0 : i32
    %c0_i32_1 = arith.constant 0 : i32
    return %c0_i32, %c0_i32_0 : i32, i32
  }
  func.func @transform_9(%arg0: i32) -> (i32, i32) {
    %c0_i32 = arith.constant 0 : i32
    %c0_i32_0 = arith.constant 0 : i32
    %c0_i32_1 = arith.constant 0 : i32
    return %c0_i32, %c0_i32_0 : i32, i32
  }
  func.func @transform_10(%arg0: i32) -> (i32, i32) {
    %c0_i32 = arith.constant 0 : i32
    %c0_i32_0 = arith.constant 0 : i32
    %c0_i32_1 = arith.constant 0 : i32
    return %c0_i32, %c0_i32_0 : i32, i32
  }
  func.func @transform_11(%arg0: i32) -> (i32, i32) {
    %c0_i32 = arith.constant 0 : i32
    %c0_i32_0 = arith.constant 0 : i32
    %c0_i32_1 = arith.constant 0 : i32
    return %c0_i32, %c0_i32_0 : i32, i32
  }
  func.func @transform_12(%arg0: i32) -> (i32, i32, i32) {
    %c0_i32 = arith.constant 0 : i32
    %c0_i32_0 = arith.constant 0 : i32
    %c0_i32_1 = arith.constant 0 : i32
    %c0_i32_2 = arith.constant 0 : i32
    return %c0_i32, %c0_i32_0, %c0_i32_1 : i32, i32, i32
  }
}

</mosaic_0001>

<llo_original>
// kernel: up_forward.1
$region0: #{up_forward.1}
  #allocation0 [shape = 'u32[]', space=smem, size = 0x4, offset = 0x4, fixed_abs, tag = 'smem constant byte address 0x4 - core index']
  #allocation1 [shape = 'u32[144,128]{1,0:T(1,128)}', space=vmem, size = 0x12000, scoped, tag = 'internal scratch']
  #allocation2 [shape = 'f32[72,256]{1,0:T(8,128)}', space=vmem, size = 0x12000, scoped, tag = 'scratch operand']
  #allocation3 [shape = 'f32[2,8,256]{2,1,0:T(8,128)}', space=vmem, size = 0x4000, scoped, tag = 'scratch operand']
  %s0 = inlined_call_operand.vmem [shape: f32[64,256], index: 0, kind: input, shape index: {}]
  %s1 = inlined_call_operand.vmem [shape: f32[9,256], index: 1, kind: input, shape index: {}]
  %s2 = inlined_call_operand.vmem [shape: f32[8,64], index: 2, kind: input, shape index: {}]
  %s3 = inlined_call_operand.vmem [shape: f32[2,8,256], index: 3, kind: input, shape index: {}]
  %s4 = inlined_call_operand.vmem [shape: bf16[4,72], index: 4, kind: input, shape index: {}]
  %s5 = inlined_call_operand.vmem [shape: f32[4,1], index: 5, kind: input, shape index: {}]
  %s6 = inlined_call_operand.vmem [shape: bf16[8,72], index: 6, kind: input, shape index: {}]
  %s7 = inlined_call_operand.vmem [shape: f32[8,1], index: 7, kind: input, shape index: {}]
  %s8 = inlined_call_operand.vmem [shape: bf16[8,72], index: 8, kind: input, shape index: {}]
  %s9 = inlined_call_operand.vmem [shape: f32[8,1], index: 9, kind: input, shape index: {}]
  %s10 = inlined_call_operand.vmem [shape: f32[8,1], index: 10, kind: input, shape index: {}]
  %s11 = inlined_call_operand.vmem [shape: f32[8,1], index: 11, kind: input, shape index: {}]
  %s12 = inlined_call_operand.vmem [shape: f32[2,8,256], index: 12, kind: output, shape index: {}]
  %s13 = sld [smem:[#allocation0]]
  $region58: #{up_forward.1} parent=0
    _
  %s15 = ssub.s32 1, %s13
  %s16 = scalar_select 0, %s15, %s13
  // Predicated region
  $region2: #{up_forward.1} parent=0 // pred_check
    _
  $region3: #{up_forward.1} parent=0 // pred_check_branch
    %18 = sbr.rel (0) target = $region5
  $region4: #{up_forward.1} parent=0 // pred_region
    _
  $region5: #{up_forward.1} parent=0 // pred_fallthru
    _
  // Predicated region
  $region6: #{up_forward.1} parent=0 // pred_check
    _
  $region7: #{up_forward.1} parent=0 // pred_check_branch
    %20 = sbr.rel (0) target = $region9
  $region8: #{up_forward.1} parent=0 // pred_region
    _
  $region9: #{up_forward.1} parent=0 // pred_fallthru
    _
  // Predicated region
  $region10: #{up_forward.1} parent=0 // pred_check
    _
  $region11: #{up_forward.1} parent=0 // pred_check_branch
    %22 = sbr.rel (0) target = $region13
  $region12: #{up_forward.1} parent=0 // pred_region
    _
  $region13: #{up_forward.1} parent=0 // pred_fallthru
    _
  // Predicated region
  $region14: #{up_forward.1} parent=0 // pred_check
    _
  $region15: #{up_forward.1} parent=0 // pred_check_branch
    %24 = sbr.rel (0) target = $region17
  $region16: #{up_forward.1} parent=0 // pred_region
    _
  $region17: #{up_forward.1} parent=0 // pred_fallthru
    _
  // Predicated region
  $region18: #{up_forward.1} parent=0 // pred_check
    _
  $region19: #{up_forward.1} parent=0 // pred_check_branch
    %26 = sbr.rel (0) target = $region21
  $region20: #{up_forward.1} parent=0 // pred_region
    _
  $region21: #{up_forward.1} parent=0 // pred_fallthru
    _
  // Predicated region
  $region22: #{up_forward.1} parent=0 // pred_check
    _
  $region23: #{up_forward.1} parent=0 // pred_check_branch
    %28 = sbr.rel (0) target = $region25
  $region24: #{up_forward.1} parent=0 // pred_region
    _
  $region25: #{up_forward.1} parent=0 // pred_fallthru
    _
  // Predicated region
  $region26: #{up_forward.1} parent=0 // pred_check
    _
  $region27: #{up_forward.1} parent=0 // pred_check_branch
    %30 = sbr.rel (0) target = $region29
  $region28: #{up_forward.1} parent=0 // pred_region
    _
  $region29: #{up_forward.1} parent=0 // pred_fallthru
    _
  // Predicated region
  $region30: #{up_forward.1} parent=0 // pred_check
    _
  $region31: #{up_forward.1} parent=0 // pred_check_branch
    %32 = sbr.rel (0) target = $region33
  $region32: #{up_forward.1} parent=0 // pred_region
    _
  $region33: #{up_forward.1} parent=0 // pred_fallthru
    _
  // Predicated region
  $region34: #{up_forward.1} parent=0 // pred_check
    _
  $region35: #{up_forward.1} parent=0 // pred_check_branch
    %34 = sbr.rel (0) target = $region37
  $region36: #{up_forward.1} parent=0 // pred_region
    _
  $region37: #{up_forward.1} parent=0 // pred_fallthru
    _
  // Predicated region
  $region38: #{up_forward.1} parent=0 // pred_check
    _
  $region39: #{up_forward.1} parent=0 // pred_check_branch
    %36 = sbr.rel (0) target = $region41
  $region40: #{up_forward.1} parent=0 // pred_region
    _
  $region41: #{up_forward.1} parent=0 // pred_fallthru
    _
  // Predicated region
  $region42: #{up_forward.1} parent=0 // pred_check
    _
  $region43: #{up_forward.1} parent=0 // pred_check_branch
    %38 = sbr.rel (0) target = $region45
  $region44: #{up_forward.1} parent=0 // pred_region
    _
  $region45: #{up_forward.1} parent=0 // pred_fallthru
    _
  // Predicated region
  $region46: #{up_forward.1} parent=0 // pred_check
    _
  $region47: #{up_forward.1} parent=0 // pred_check_branch
    %40 = sbr.rel (0) target = $region49
  $region48: #{up_forward.1} parent=0 // pred_region
    _
  $region49: #{up_forward.1} parent=0 // pred_fallthru
    _
  %v42 = vld [vmem:[%s1] sm:$0xff]
  %v43 = vld [vmem:[%s1 + $0x8] sm:$0xff]
  %v44 = vld [vmem:[%s1 + $0x10] sm:$0x1]
  %v45 = vld [vmem:[%s1 + $0x18] sm:$0x1]
  %v46 = vld [vmem:[%s2] sm:$0xff]
  %v47 = vld [vmem:[%s0] sm:$0xff]
  %v48 = vld [vmem:[%s0 + $0x8] sm:$0xff]
  %v49 = vld [vmem:[%s0 + $0x10] sm:$0xff]
  %v50 = vld [vmem:[%s0 + $0x18] sm:$0xff]
  %v51 = vld [vmem:[%s0 + $0x20] sm:$0xff]
  %v52 = vld [vmem:[%s0 + $0x28] sm:$0xff]
  %v53 = vld [vmem:[%s0 + $0x30] sm:$0xff]
  %v54 = vld [vmem:[%s0 + $0x38] sm:$0xff]
  %v55 = vld [vmem:[%s0 + $0x40] sm:$0xff]
  %v56 = vld [vmem:[%s0 + $0x48] sm:$0xff]
  %v57 = vld [vmem:[%s0 + $0x50] sm:$0xff]
  %v58 = vld [vmem:[%s0 + $0x58] sm:$0xff]
  %v59 = vld [vmem:[%s0 + $0x60] sm:$0xff]
  %v60 = vld [vmem:[%s0 + $0x68] sm:$0xff]
  %v61 = vld [vmem:[%s0 + $0x70] sm:$0xff]
  %v62 = vld [vmem:[%s0 + $0x78] sm:$0xff]
  %vm63 = vcmask 523264
  %v65 = vsel %vm63, %v46, 0
  %67 = vmatprep.subr.mxu0 %v48
  %68 = vmatpush1.msra.mxu0 %v47
  %69 = vmatprep.subr.mxu0 %v50
  %70 = vmatpush1.msra.mxu0 %v49
  %71 = vmatprep.subr.mxu0 %v52
  %72 = vmatpush1.msra.mxu0 %v51
  %73 = vmatprep.subr.mxu0 %v54
  %74 = vmatpush1.msra.mxu0 %v53
  %75 = vmatprep.subr.mxu0 %v56
  %76 = vmatpush1.msra.mxu0 %v55
  %77 = vmatprep.subr.mxu0 %v58
  %78 = vmatpush1.msra.mxu0 %v57
  %79 = vmatprep.subr.mxu0 %v60
  %80 = vmatpush1.msra.mxu0 %v59
  %81 = vmatprep.subr.mxu0 %v62
  %82 = vmatpush1.msra.mxu0 %v61
  %83 = vmatprep.subr.mxu0 0.0
  %84 = vmatpush1.msra.mxu0 0.0
  %85 = vmatprep.subr.mxu0 0.0
  %86 = vmatpush1.msra.mxu0 0.0
  %87 = vmatprep.subr.mxu0 0.0
  %88 = vmatpush1.msra.mxu0 0.0
  %89 = vmatprep.subr.mxu0 0.0
  %90 = vmatpush1.msra.mxu0 0.0
  %91 = vmatprep.subr.mxu0 0.0
  %92 = vmatpush1.msra.mxu0 0.0
  %93 = vmatprep.subr.mxu0 0.0
  %94 = vmatpush1.msra.mxu0 0.0
  %95 = vmatprep.subr.mxu0 0.0
  %96 = vmatpush1.msra.mxu0 0.0
  %97 = vmatprep.subr.mxu0 0.0
  %98 = vmatpush1.msra.mxu0 0.0
  %99 = vmatprep.subr.mxu0 0.0
  %100 = vmatpush1.msra.mxu0 0.0
  %101 = vmatprep.subr.mxu0 0.0
  %102 = vmatpush1.msra.mxu0 0.0
  %103 = vmatprep.subr.mxu0 0.0
  %104 = vmatpush1.msra.mxu0 0.0
  %105 = vmatprep.subr.mxu0 0.0
  %106 = vmatpush1.msra.mxu0 0.0
  %107 = vmatprep.subr.mxu0 0.0
  %108 = vmatpush1.msra.mxu0 0.0
  %109 = vmatprep.subr.mxu0 0.0
  %110 = vmatpush1.msra.mxu0 0.0
  %111 = vmatprep.subr.mxu0 0.0
  %112 = vmatpush1.msra.mxu0 0.0
  %113 = vmatprep.subr.mxu0 0.0
  %114 = vmatpush1.msra.mxu0 0.0
  %115 = vmatprep.subr.mxu0 0.0
  %116 = vmatpush1.msra.mxu0 0.0
  %117 = vmatprep.subr.mxu0 0.0
  %118 = vmatpush1.msra.mxu0 0.0
  %119 = vmatprep.subr.mxu0 0.0
  %120 = vmatpush1.msra.mxu0 0.0
  %121 = vmatprep.subr.mxu0 0.0
  %122 = vmatpush1.msra.mxu0 0.0
  %123 = vmatprep.subr.mxu0 0.0
  %124 = vmatpush1.msra.mxu0 0.0
  %125 = vmatprep.subr.mxu0 0.0
  %126 = vmatpush1.msra.mxu0 0.0
  %127 = vmatprep.subr.mxu0 0.0
  %128 = vmatpush1.msra.mxu0 0.0
  %129 = vmatprep.subr.mxu0 0.0
  %130 = vmatpush1.msra.mxu0 0.0
  %131 = vmatprep.mubr.f32.mxu0 0.0
  %132 = vmatmul.mubr.f32.gmra.mrb[0].mxu0 %v65
  %v133 = vpop.f32.mrb[0].mxu0
  %v134 = vadd.f32 0.0, %v133
  %v135 = vpop.f32.mrb[0].mxu0
  %v136 = vadd.f32 0.0, %v135
  %137 = vdwg.mxu0
  %v138 = vld [vmem:[%s3] sm:$0xff]
  %v139 = vld [vmem:[%s3 + $0x8] sm:$0xff]
  %140 = vrot.lane.b32.xlu0 %v138, 17
  %v141 = vpop.permute.xlu0 %140
  %142 = vrot.lane.b32.xlu0 %v139, 17
  %v143 = vpop.permute.xlu0 %142
  %v144 = vlaneseq
  %v145 = vand.u32 %v144, 127
  %vm146 = vcmp.lt.s32.totalorder %v145, 17
  %v147 = vsel %vm146, %v141, %v143
  %v148 = vsel %vm146, %v143, %v141
  %v149 = vlaneseq
  %v150 = vshrl.u32 %v149, 7
  %v151 = vsub.s32 0, %v150
  %v152 = vrot.slane %v42, %v151
  %v153 = vlaneseq
  %v154 = vshrl.u32 %v153, 7
  %v155 = vsub.s32 0, %v154
  %v156 = vrot.slane %v43, %v155
  %v157 = vmul.f32 %v148, %v152
  %v158 = vmul.f32 %v147, %v156
  %159 = vst [vmem:[#allocation2] sm:$0xff] %v157
  %160 = vst [vmem:[#allocation2 + $0x8] sm:$0xff] %v158
  %161 = vrot.lane.b32.xlu0 %v138, 16
  %v162 = vpop.permute.xlu0 %161
  %163 = vrot.lane.b32.xlu0 %v139, 16
  %v164 = vpop.permute.xlu0 %163
  %vm165 = vcmp.lt.s32.totalorder %v145, 16
  %v166 = vsel %vm165, %v162, %v164
  %v167 = vsel %vm165, %v164, %v162
  %v168 = vlaneseq
  %v169 = vshrl.u32 %v168, 7
  %v170 = vsub.s32 1, %v169
  %v171 = vrot.slane %v42, %v170
  %v172 = vlaneseq
  %v173 = vshrl.u32 %v172, 7
  %v174 = vsub.s32 1, %v173
  %v175 = vrot.slane %v43, %v174
  %v176 = vmul.f32 %v167, %v171
  %v177 = vmul.f32 %v166, %v175
  %178 = vst [vmem:[#allocation2 + $0x10] sm:$0xff] %v176
  %179 = vst [vmem:[#allocation2 + $0x18] sm:$0xff] %v177
  %180 = vrot.lane.b32.xlu0 %v138, 15
  %v181 = vpop.permute.xlu0 %180
  %182 = vrot.lane.b32.xlu0 %v139, 15
  %v183 = vpop.permute.xlu0 %182
  %vm184 = vcmp.lt.s32.totalorder %v145, 15
  %v185 = vsel %vm184, %v181, %v183
  %v186 = vsel %vm184, %v183, %v181
  %v187 = vlaneseq
  %v188 = vshrl.u32 %v187, 7
  %v189 = vsub.s32 2, %v188
  %v190 = vrot.slane %v42, %v189
  %v191 = vlaneseq
  %v192 = vshrl.u32 %v191, 7
  %v193 = vsub.s32 2, %v192
  %v194 = vrot.slane %v43, %v193
  %v195 = vmul.f32 %v186, %v190
  %v196 = vmul.f32 %v185, %v194
  %197 = vst [vmem:[#allocation2 + $0x20] sm:$0xff] %v195
  %198 = vst [vmem:[#allocation2 + $0x28] sm:$0xff] %v196
  %199 = vrot.lane.b32.xlu0 %v138, 1
  %v200 = vpop.permute.xlu0 %199
  %201 = vrot.lane.b32.xlu0 %v139, 1
  %v202 = vpop.permute.xlu0 %201
  %vm203 = vcmp.lt.s32.totalorder %v145, 1
  %v204 = vsel %vm203, %v200, %v202
  %v205 = vsel %vm203, %v202, %v200
  %v206 = vlaneseq
  %v207 = vshrl.u32 %v206, 7
  %v208 = vsub.s32 3, %v207
  %v209 = vrot.slane %v42, %v208
  %v210 = vlaneseq
  %v211 = vshrl.u32 %v210, 7
  %v212 = vsub.s32 3, %v211
  %v213 = vrot.slane %v43, %v212
  %v214 = vmul.f32 %v205, %v209
  %v215 = vmul.f32 %v204, %v213
  %216 = vst [vmem:[#allocation2 + $0x30] sm:$0xff] %v214
  %217 = vst [vmem:[#allocation2 + $0x38] sm:$0xff] %v215
  %218 = vst [vmem:[#allocation2 + $0x40] sm:$0xff] %v138
  %219 = vst [vmem:[#allocation2 + $0x48] sm:$0xff] %v139
  %220 = vrot.lane.b32.xlu0 %v138, 127
  %v221 = vpop.permute.xlu0 %220
  %222 = vrot.lane.b32.xlu0 %v139, 127
  %v223 = vpop.permute.xlu0 %222
  %vm224 = vcmp.lt.s32.totalorder %v145, 127
  %v225 = vsel %vm224, %v221, %v223
  %v226 = vsel %vm224, %v223, %v221
  %v227 = vlaneseq
  %v228 = vshrl.u32 %v227, 7
  %v229 = vsub.s32 5, %v228
  %v230 = vrot.slane %v42, %v229
  %v231 = vlaneseq
  %v232 = vshrl.u32 %v231, 7
  %v233 = vsub.s32 5, %v232
  %v234 = vrot.slane %v43, %v233
  %v235 = vmul.f32 %v225, %v230
  %v236 = vmul.f32 %v226, %v234
  %237 = vst [vmem:[#allocation2 + $0x50] sm:$0xff] %v235
  %238 = vst [vmem:[#allocation2 + $0x58] sm:$0xff] %v236
  %239 = vrot.lane.b32.xlu0 %v138, 113
  %v240 = vpop.permute.xlu0 %239
  %241 = vrot.lane.b32.xlu0 %v139, 113
  %v242 = vpop.permute.xlu0 %241
  %vm243 = vcmp.lt.s32.totalorder %v145, 113
  %v244 = vsel %vm243, %v240, %v242
  %v245 = vsel %vm243, %v242, %v240
  %v246 = vlaneseq
  %v247 = vshrl.u32 %v246, 7
  %v248 = vsub.s32 6, %v247
  %v249 = vrot.slane %v42, %v248
  %v250 = vlaneseq
  %v251 = vshrl.u32 %v250, 7
  %v252 = vsub.s32 6, %v251
  %v253 = vrot.slane %v43, %v252
  %v254 = vmul.f32 %v244, %v249
  %v255 = vmul.f32 %v245, %v253
  %256 = vst [vmem:[#allocation2 + $0x60] sm:$0xff] %v254
  %257 = vst [vmem:[#allocation2 + $0x68] sm:$0xff] %v255
  %258 = vrot.lane.b32.xlu0 %v138, 112
  %v259 = vpop.permute.xlu0 %258
  %260 = vrot.lane.b32.xlu0 %v139, 112
  %v261 = vpop.permute.xlu0 %260
  %vm262 = vcmp.lt.s32.totalorder %v145, 112
  %v263 = vsel %vm262, %v259, %v261
  %v264 = vsel %vm262, %v261, %v259
  %v265 = vlaneseq
  %v266 = vshrl.u32 %v265, 7
  %v267 = vsub.s32 7, %v266
  %v268 = vrot.slane %v42, %v267
  %v269 = vlaneseq
  %v270 = vshrl.u32 %v269, 7
  %v271 = vsub.s32 7, %v270
  %v272 = vrot.slane %v43, %v271
  %v273 = vmul.f32 %v263, %v268
  %v274 = vmul.f32 %v264, %v272
  %275 = vst [vmem:[#allocation2 + $0x70] sm:$0xff] %v273
  %276 = vst [vmem:[#allocation2 + $0x78] sm:$0xff] %v274
  %277 = vrot.lane.b32.xlu0 %v138, 111
  %v278 = vpop.permute.xlu0 %277
  %279 = vrot.lane.b32.xlu0 %v139, 111
  %v280 = vpop.permute.xlu0 %279
  %vm281 = vcmp.lt.s32.totalorder %v145, 111
  %v282 = vsel %vm281, %v278, %v280
  %v283 = vsel %vm281, %v280, %v278
  %v284 = vlaneseq
  %v285 = vshrl.u32 %v284, 7
  %v286 = vsub.s32 0, %v285
  %v287 = vrot.slane %v44, %v286
  %v288 = vlaneseq
  %v289 = vshrl.u32 %v288, 7
  %v290 = vsub.s32 0, %v289
  %v291 = vrot.slane %v45, %v290
  %v292 = vmul.f32 %v282, %v287
  %v293 = vmul.f32 %v283, %v291
  %294 = vst [vmem:[#allocation2 + $0x80] sm:$0xff] %v292
  %295 = vst [vmem:[#allocation2 + $0x88] sm:$0xff] %v293
  %v296 = vld [vmem:[#allocation2] sm:$0xff]
  %v297 = vld [vmem:[#allocation2 + $0x8] sm:$0xff]
  %v298 = vld [vmem:[#allocation2 + $0x10] sm:$0xff]
  %v299 = vld [vmem:[#allocation2 + $0x18] sm:$0xff]
  %v300 = vld [vmem:[#allocation2 + $0x20] sm:$0xff]
  %v301 = vld [vmem:[#allocation2 + $0x28] sm:$0xff]
  %v302 = vld [vmem:[#allocation2 + $0x30] sm:$0xff]
  %v303 = vld [vmem:[#allocation2 + $0x38] sm:$0xff]
  %v304 = vld [vmem:[#allocation2 + $0x40] sm:$0xff]
  %v305 = vld [vmem:[#allocation2 + $0x48] sm:$0xff]
  %v306 = vld [vmem:[#allocation2 + $0x50] sm:$0xff]
  %v307 = vld [vmem:[#allocation2 + $0x58] sm:$0xff]
  %v308 = vld [vmem:[#allocation2 + $0x60] sm:$0xff]
  %v309 = vld [vmem:[#allocation2 + $0x68] sm:$0xff]
  %v310 = vld [vmem:[#allocation2 + $0x70] sm:$0xff]
  %v311 = vld [vmem:[#allocation2 + $0x78] sm:$0xff]
  %v312 = vld [vmem:[#allocation2 + $0x80] sm:$0xff]
  %v313 = vld [vmem:[#allocation2 + $0x88] sm:$0xff]
  %v314 = vpack.c.bf16 %v298, %v296
  %v315 = vpack.c.bf16 %v299, %v297
  %v316 = vpack.c.bf16 %v302, %v300
  %v317 = vpack.c.bf16 %v303, %v301
  %v318 = vpack.c.bf16 %v306, %v304
  %v319 = vpack.c.bf16 %v307, %v305
  %v320 = vpack.c.bf16 %v310, %v308
  %v321 = vpack.c.bf16 %v311, %v309
  %v322 = vpack.c.bf16 %v312, %v312
  %v323 = vpack.c.bf16 %v313, %v313
  %v324 = vld [vmem:[%s4] sm:$0x3]
  %v325 = vld [vmem:[%s5] sm:$0xf]
  %327 = vset.pattern.permute.xlu0 0
  %328 = vperm.xlu0 %327, %v325
  %v329 = vpop.permute.xlu0 %328
  %vm331 = vcmask 588800
  %v333 = vsel %vm331, %v324, 0
  %vm335 = vcmask 1043456
  %v337 = vsel %vm335, %v322, 0
  %v340 = vsel %vm335, %v323, 0
  %342 = vmatprep.subr.bf16.mxu0 %v315
  %343 = vmatpush1.bf16.msra.mxu0 %v314
  %344 = vmatprep.subr.bf16.mxu0 %v317
  %345 = vmatpush1.bf16.msra.mxu0 %v316
  %346 = vmatprep.subr.bf16.mxu0 %v319
  %347 = vmatpush1.bf16.msra.mxu0 %v318
  %348 = vmatprep.subr.bf16.mxu0 %v321
  %349 = vmatpush1.bf16.msra.mxu0 %v320
  %350 = vmatprep.subr.bf16.mxu0 %v340
  %351 = vmatpush1.bf16.msra.mxu0 %v337
  %352 = vmatprep.subr.bf16.mxu0 0
  %353 = vmatpush1.bf16.msra.mxu0 0
  %354 = vmatprep.subr.bf16.mxu0 0
  %355 = vmatpush1.bf16.msra.mxu0 0
  %356 = vmatprep.subr.bf16.mxu0 0
  %357 = vmatpush1.bf16.msra.mxu0 0
  %358 = vmatprep.subr.bf16.mxu0 0
  %359 = vmatpush1.bf16.msra.mxu0 0
  %360 = vmatprep.subr.bf16.mxu0 0
  %361 = vmatpush1.bf16.msra.mxu0 0
  %362 = vmatprep.subr.bf16.mxu0 0
  %363 = vmatpush1.bf16.msra.mxu0 0
  %364 = vmatprep.subr.bf16.mxu0 0
  %365 = vmatpush1.bf16.msra.mxu0 0
  %366 = vmatprep.subr.bf16.mxu0 0
  %367 = vmatpush1.bf16.msra.mxu0 0
  %368 = vmatprep.subr.bf16.mxu0 0
  %369 = vmatpush1.bf16.msra.mxu0 0
  %370 = vmatprep.subr.bf16.mxu0 0
  %371 = vmatpush1.bf16.msra.mxu0 0
  %372 = vmatprep.subr.bf16.mxu0 0
  %373 = vmatpush1.bf16.msra.mxu0 0
  %374 = vmatprep.mubr.bf16.mxu0 0
  %375 = vmatmul.mubr.bf16.gmra.mrb[0].mxu0 %v333
  %v376 = vpop.f32.mrb[0].mxu0
  %v377 = vadd.f32 %v329, %v376
  %v378 = vpop.f32.mrb[0].mxu0
  %v379 = vadd.f32 %v329, %v378
  %v380 = vpop.f32.mrb[0].mxu0
  %v381 = vpop.f32.mrb[0].mxu0
  %382 = vdwg.mxu0
  %v385 = vrot.slane %v134, 4
  %v386 = vrot.slane %v136, 4
  %v389 = vsel %vm335, %v377, %v385
  %v390 = vsel %vm335, %v379, %v386
  %391 = vrot.lane.b32.xlu0 %v389, 17
  %v392 = vpop.permute.xlu0 %391
  %393 = vrot.lane.b32.xlu0 %v390, 17
  %v394 = vpop.permute.xlu0 %393
  %v395 = vsel %vm146, %v392, %v394
  %v396 = vsel %vm146, %v394, %v392
  %v397 = vmul.f32 %v396, %v152
  %v398 = vmul.f32 %v395, %v156
  %399 = vst [vmem:[#allocation2] sm:$0xff] %v397
  %400 = vst [vmem:[#allocation2 + $0x8] sm:$0xff] %v398
  %401 = vrot.lane.b32.xlu0 %v389, 16
  %v402 = vpop.permute.xlu0 %401
  %403 = vrot.lane.b32.xlu0 %v390, 16
  %v404 = vpop.permute.xlu0 %403
  %v405 = vsel %vm165, %v402, %v404
  %v406 = vsel %vm165, %v404, %v402
  %v407 = vmul.f32 %v406, %v171
  %v408 = vmul.f32 %v405, %v175
  %409 = vst [vmem:[#allocation2 + $0x10] sm:$0xff] %v407
  %410 = vst [vmem:[#allocation2 + $0x18] sm:$0xff] %v408
  %411 = vrot.lane.b32.xlu0 %v389, 15
  %v412 = vpop.permute.xlu0 %411
  %413 = vrot.lane.b32.xlu0 %v390, 15
  %v414 = vpop.permute.xlu0 %413
  %v415 = vsel %vm184, %v412, %v414
  %v416 = vsel %vm184, %v414, %v412
  %v417 = vmul.f32 %v416, %v190
  %v418 = vmul.f32 %v415, %v194
  %419 = vst [vmem:[#allocation2 + $0x20] sm:$0xff] %v417
  %420 = vst [vmem:[#allocation2 + $0x28] sm:$0xff] %v418
  %421 = vrot.lane.b32.xlu0 %v389, 1
  %v422 = vpop.permute.xlu0 %421
  %423 = vrot.lane.b32.xlu0 %v390, 1
  %v424 = vpop.permute.xlu0 %423
  %v425 = vsel %vm203, %v422, %v424
  %v426 = vsel %vm203, %v424, %v422
  %v427 = vmul.f32 %v426, %v209
  %v428 = vmul.f32 %v425, %v213
  %429 = vst [vmem:[#allocation2 + $0x30] sm:$0xff] %v427
  %430 = vst [vmem:[#allocation2 + $0x38] sm:$0xff] %v428
  %431 = vst [vmem:[#allocation2 + $0x40] sm:$0xff] %v389
  %432 = vst [vmem:[#allocation2 + $0x48] sm:$0xff] %v390
  %433 = vrot.lane.b32.xlu0 %v389, 127
  %v434 = vpop.permute.xlu0 %433
  %435 = vrot.lane.b32.xlu0 %v390, 127
  %v436 = vpop.permute.xlu0 %435
  %v437 = vsel %vm224, %v434, %v436
  %v438 = vsel %vm224, %v436, %v434
  %v439 = vmul.f32 %v437, %v230
  %v440 = vmul.f32 %v438, %v234
  %441 = vst [vmem:[#allocation2 + $0x50] sm:$0xff] %v439
  %442 = vst [vmem:[#allocation2 + $0x58] sm:$0xff] %v440
  %443 = vrot.lane.b32.xlu0 %v389, 113
  %v444 = vpop.permute.xlu0 %443
  %445 = vrot.lane.b32.xlu0 %v390, 113
  %v446 = vpop.permute.xlu0 %445
  %v447 = vsel %vm243, %v444, %v446
  %v448 = vsel %vm243, %v446, %v444
  %v449 = vmul.f32 %v447, %v249
  %v450 = vmul.f32 %v448, %v253
  %451 = vst [vmem:[#allocation2 + $0x60] sm:$0xff] %v449
  %452 = vst [vmem:[#allocation2 + $0x68] sm:$0xff] %v450
  %453 = vrot.lane.b32.xlu0 %v389, 112
  %v454 = vpop.permute.xlu0 %453
  %455 = vrot.lane.b32.xlu0 %v390, 112
  %v456 = vpop.permute.xlu0 %455
  %v457 = vsel %vm262, %v454, %v456
  %v458 = vsel %vm262, %v456, %v454
  %v459 = vmul.f32 %v457, %v268
  %v460 = vmul.f32 %v458, %v272
  %461 = vst [vmem:[#allocation2 + $0x70] sm:$0xff] %v459
  %462 = vst [vmem:[#allocation2 + $0x78] sm:$0xff] %v460
  %463 = vrot.lane.b32.xlu0 %v389, 111
  %v464 = vpop.permute.xlu0 %463
  %465 = vrot.lane.b32.xlu0 %v390, 111
  %v466 = vpop.permute.xlu0 %465
  %v467 = vsel %vm281, %v464, %v466
  %v468 = vsel %vm281, %v466, %v464
  %v469 = vmul.f32 %v467, %v287
  %v470 = vmul.f32 %v468, %v291
  %471 = vst [vmem:[#allocation2 + $0x80] sm:$0xff] %v469
  %472 = vst [vmem:[#allocation2 + $0x88] sm:$0xff] %v470
  %v473 = vld [vmem:[#allocation2] sm:$0xff]
  %v474 = vld [vmem:[#allocation2 + $0x8] sm:$0xff]
  %v475 = vld [vmem:[#allocation2 + $0x10] sm:$0xff]
  %v476 = vld [vmem:[#allocation2 + $0x18] sm:$0xff]
  %v477 = vld [vmem:[#allocation2 + $0x20] sm:$0xff]
  %v478 = vld [vmem:[#allocation2 + $0x28] sm:$0xff]
  %v479 = vld [vmem:[#allocation2 + $0x30] sm:$0xff]
  %v480 = vld [vmem:[#allocation2 + $0x38] sm:$0xff]
  %v481 = vld [vmem:[#allocation2 + $0x40] sm:$0xff]
  %v482 = vld [vmem:[#allocation2 + $0x48] sm:$0xff]
  %v483 = vld [vmem:[#allocation2 + $0x50] sm:$0xff]
  %v484 = vld [vmem:[#allocation2 + $0x58] sm:$0xff]
  %v485 = vld [vmem:[#allocation2 + $0x60] sm:$0xff]
  %v486 = vld [vmem:[#allocation2 + $0x68] sm:$0xff]
  %v487 = vld [vmem:[#allocation2 + $0x70] sm:$0xff]
  %v488 = vld [vmem:[#allocation2 + $0x78] sm:$0xff]
  %v489 = vld [vmem:[#allocation2 + $0x80] sm:$0xff]
  %v490 = vld [vmem:[#allocation2 + $0x88] sm:$0xff]
  %v491 = vpack.c.bf16 %v475, %v473
  %v492 = vpack.c.bf16 %v476, %v474
  %v493 = vpack.c.bf16 %v479, %v477
  %v494 = vpack.c.bf16 %v480, %v478
  %v495 = vpack.c.bf16 %v483, %v481
  %v496 = vpack.c.bf16 %v484, %v482
  %v497 = vpack.c.bf16 %v487, %v485
  %v498 = vpack.c.bf16 %v488, %v486
  %v499 = vpack.c.bf16 %v489, %v489
  %v500 = vpack.c.bf16 %v490, %v490
  %v501 = vld [vmem:[%s6] sm:$0xf]
  %v502 = vld [vmem:[%s7] sm:$0xff]
  %504 = vset.pattern.permute.xlu0 0
  %505 = vperm.xlu0 %504, %v502
  %v506 = vpop.permute.xlu0 %505
  %v509 = vsel %vm331, %v501, 0
  %v512 = vsel %vm335, %v499, 0
  %v515 = vsel %vm335, %v500, 0
  %517 = vmatprep.subr.bf16.mxu0 %v492
  %518 = vmatpush1.bf16.msra.mxu0 %v491
  %519 = vmatprep.subr.bf16.mxu0 %v494
  %520 = vmatpush1.bf16.msra.mxu0 %v493
  %521 = vmatprep.subr.bf16.mxu0 %v496
  %522 = vmatpush1.bf16.msra.mxu0 %v495
  %523 = vmatprep.subr.bf16.mxu0 %v498
  %524 = vmatpush1.bf16.msra.mxu0 %v497
  %525 = vmatprep.subr.bf16.mxu0 %v515
  %526 = vmatpush1.bf16.msra.mxu0 %v512
  %527 = vmatprep.subr.bf16.mxu0 0
  %528 = vmatpush1.bf16.msra.mxu0 0
  %529 = vmatprep.subr.bf16.mxu0 0
  %530 = vmatpush1.bf16.msra.mxu0 0
  %531 = vmatprep.subr.bf16.mxu0 0
  %532 = vmatpush1.bf16.msra.mxu0 0
  %533 = vmatprep.subr.bf16.mxu0 0
  %534 = vmatpush1.bf16.msra.mxu0 0
  %535 = vmatprep.subr.bf16.mxu0 0
  %536 = vmatpush1.bf16.msra.mxu0 0
  %537 = vmatprep.subr.bf16.mxu0 0
  %538 = vmatpush1.bf16.msra.mxu0 0
  %539 = vmatprep.subr.bf16.mxu0 0
  %540 = vmatpush1.bf16.msra.mxu0 0
  %541 = vmatprep.subr.bf16.mxu0 0
  %542 = vmatpush1.bf16.msra.mxu0 0
  %543 = vmatprep.subr.bf16.mxu0 0
  %544 = vmatpush1.bf16.msra.mxu0 0
  %545 = vmatprep.subr.bf16.mxu0 0
  %546 = vmatpush1.bf16.msra.mxu0 0
  %547 = vmatprep.subr.bf16.mxu0 0
  %548 = vmatpush1.bf16.msra.mxu0 0
  %549 = vmatprep.mubr.bf16.mxu0 0
  %550 = vmatmul.mubr.bf16.gmra.mrb[0].mxu0 %v509
  %v551 = vpop.f32.mrb[0].mxu0
  %v552 = vadd.f32 %v506, %v551
  %v553 = vpop.f32.mrb[0].mxu0
  %v554 = vadd.f32 %v506, %v553
  %v555 = vpop.f32.mrb[0].mxu0
  %v556 = vpop.f32.mrb[0].mxu0
  %557 = vdwg.mxu0
  %558 = vst [vmem:[#allocation3] sm:$0xff] %v552
  %559 = vst [vmem:[#allocation3 + $0x8] sm:$0xff] %v554
  %v560 = vadd.f32 %v552, %v554
  %561 = vadd.xlane.f32.xlu0 %v560
  %v562 = vpop.xlane.xlu0 %561
  %v563 = vadd.f32 %v562, 0.0
  %v564 = vmul.f32 %v552, %v552
  %v565 = vmul.f32 %v554, %v554
  %v566 = vadd.f32 %v564, %v565
  %567 = vadd.xlane.f32.xlu0 %v566
  %v568 = vpop.xlane.xlu0 %567
  %v569 = vadd.f32 %v568, 0.0
  %s570 = scalar_lea.vmem %s3, 16
  %v571 = vld [vmem:[%s570] sm:$0xff]
  %v572 = vld [vmem:[%s570 + $0x8] sm:$0xff]
  %573 = vrot.lane.b32.xlu0 %v571, 17
  %v574 = vpop.permute.xlu0 %573
  %575 = vrot.lane.b32.xlu0 %v572, 17
  %v576 = vpop.permute.xlu0 %575
  %v577 = vsel %vm146, %v574, %v576
  %v578 = vsel %vm146, %v576, %v574
  %v579 = vmul.f32 %v578, %v152
  %v580 = vmul.f32 %v577, %v156
  %581 = vst [vmem:[#allocation2] sm:$0xff] %v579
  %582 = vst [vmem:[#allocation2 + $0x8] sm:$0xff] %v580
  %583 = vrot.lane.b32.xlu0 %v571, 16
  %v584 = vpop.permute.xlu0 %583
  %585 = vrot.lane.b32.xlu0 %v572, 16
  %v586 = vpop.permute.xlu0 %585
  %v587 = vsel %vm165, %v584, %v586
  %v588 = vsel %vm165, %v586, %v584
  %v589 = vmul.f32 %v588, %v171
  %v590 = vmul.f32 %v587, %v175
  %591 = vst [vmem:[#allocation2 + $0x10] sm:$0xff] %v589
  %592 = vst [vmem:[#allocation2 + $0x18] sm:$0xff] %v590
  %593 = vrot.lane.b32.xlu0 %v571, 15
  %v594 = vpop.permute.xlu0 %593
  %595 = vrot.lane.b32.xlu0 %v572, 15
  %v596 = vpop.permute.xlu0 %595
  %v597 = vsel %vm184, %v594, %v596
  %v598 = vsel %vm184, %v596, %v594
  %v599 = vmul.f32 %v598, %v190
  %v600 = vmul.f32 %v597, %v194
  %601 = vst [vmem:[#allocation2 + $0x20] sm:$0xff] %v599
  %602 = vst [vmem:[#allocation2 + $0x28] sm:$0xff] %v600
  %603 = vrot.lane.b32.xlu0 %v571, 1
  %v604 = vpop.permute.xlu0 %603
  %605 = vrot.lane.b32.xlu0 %v572, 1
  %v606 = vpop.permute.xlu0 %605
  %v607 = vsel %vm203, %v604, %v606
  %v608 = vsel %vm203, %v606, %v604
  %v609 = vmul.f32 %v608, %v209
  %v610 = vmul.f32 %v607, %v213
  %611 = vst [vmem:[#allocation2 + $0x30] sm:$0xff] %v609
  %612 = vst [vmem:[#allocation2 + $0x38] sm:$0xff] %v610
  %613 = vst [vmem:[#allocation2 + $0x40] sm:$0xff] %v571
  %614 = vst [vmem:[#allocation2 + $0x48] sm:$0xff] %v572
  %615 = vrot.lane.b32.xlu0 %v571, 127
  %v616 = vpop.permute.xlu0 %615
  %617 = vrot.lane.b32.xlu0 %v572, 127
  %v618 = vpop.permute.xlu0 %617
  %v619 = vsel %vm224, %v616, %v618
  %v620 = vsel %vm224, %v618, %v616
  %v621 = vmul.f32 %v619, %v230
  %v622 = vmul.f32 %v620, %v234
  %623 = vst [vmem:[#allocation2 + $0x50] sm:$0xff] %v621
  %624 = vst [vmem:[#allocation2 + $0x58] sm:$0xff] %v622
  %625 = vrot.lane.b32.xlu0 %v571, 113
  %v626 = vpop.permute.xlu0 %625
  %627 = vrot.lane.b32.xlu0 %v572, 113
  %v628 = vpop.permute.xlu0 %627
  %v629 = vsel %vm243, %v626, %v628
  %v630 = vsel %vm243, %v628, %v626
  %v631 = vmul.f32 %v629, %v249
  %v632 = vmul.f32 %v630, %v253
  %633 = vst [vmem:[#allocation2 + $0x60] sm:$0xff] %v631
  %634 = vst [vmem:[#allocation2 + $0x68] sm:$0xff] %v632
  %635 = vrot.lane.b32.xlu0 %v571, 112
  %v636 = vpop.permute.xlu0 %635
  %637 = vrot.lane.b32.xlu0 %v572, 112
  %v638 = vpop.permute.xlu0 %637
  %v639 = vsel %vm262, %v636, %v638
  %v640 = vsel %vm262, %v638, %v636
  %v641 = vmul.f32 %v639, %v268
  %v642 = vmul.f32 %v640, %v272
  %643 = vst [vmem:[#allocation2 + $0x70] sm:$0xff] %v641
  %644 = vst [vmem:[#allocation2 + $0x78] sm:$0xff] %v642
  %645 = vrot.lane.b32.xlu0 %v571, 111
  %v646 = vpop.permute.xlu0 %645
  %647 = vrot.lane.b32.xlu0 %v572, 111
  %v648 = vpop.permute.xlu0 %647
  %v649 = vsel %vm281, %v646, %v648
  %v650 = vsel %vm281, %v648, %v646
  %v651 = vmul.f32 %v649, %v287
  %v652 = vmul.f32 %v650, %v291
  %653 = vst [vmem:[#allocation2 + $0x80] sm:$0xff] %v651
  %654 = vst [vmem:[#allocation2 + $0x88] sm:$0xff] %v652
  %v655 = vld [vmem:[#allocation2] sm:$0xff]
  %v656 = vld [vmem:[#allocation2 + $0x8] sm:$0xff]
  %v657 = vld [vmem:[#allocation2 + $0x10] sm:$0xff]
  %v658 = vld [vmem:[#allocation2 + $0x18] sm:$0xff]
  %v659 = vld [vmem:[#allocation2 + $0x20] sm:$0xff]
  %v660 = vld [vmem:[#allocation2 + $0x28] sm:$0xff]
  %v661 = vld [vmem:[#allocation2 + $0x30] sm:$0xff]
  %v662 = vld [vmem:[#allocation2 + $0x38] sm:$0xff]
  %v663 = vld [vmem:[#allocation2 + $0x40] sm:$0xff]
  %v664 = vld [vmem:[#allocation2 + $0x48] sm:$0xff]
  %v665 = vld [vmem:[#allocation2 + $0x50] sm:$0xff]
  %v666 = vld [vmem:[#allocation2 + $0x58] sm:$0xff]
  %v667 = vld [vmem:[#allocation2 + $0x60] sm:$0xff]
  %v668 = vld [vmem:[#allocation2 + $0x68] sm:$0xff]
  %v669 = vld [vmem:[#allocation2 + $0x70] sm:$0xff]
  %v670 = vld [vmem:[#allocation2 + $0x78] sm:$0xff]
  %v671 = vld [vmem:[#allocation2 + $0x80] sm:$0xff]
  %v672 = vld [vmem:[#allocation2 + $0x88] sm:$0xff]
  %v673 = vpack.c.bf16 %v657, %v655
  %v674 = vpack.c.bf16 %v658, %v656
  %v675 = vpack.c.bf16 %v661, %v659
  %v676 = vpack.c.bf16 %v662, %v660
  %v677 = vpack.c.bf16 %v665, %v663
  %v678 = vpack.c.bf16 %v666, %v664
  %v679 = vpack.c.bf16 %v669, %v667
  %v680 = vpack.c.bf16 %v670, %v668
  %v681 = vpack.c.bf16 %v671, %v671
  %v682 = vpack.c.bf16 %v672, %v672
  %v683 = vld [vmem:[%s4] sm:$0x3]
  %v684 = vld [vmem:[%s5] sm:$0xf]
  %686 = vset.pattern.permute.xlu0 0
  %687 = vperm.xlu0 %686, %v684
  %v688 = vpop.permute.xlu0 %687
  %v691 = vsel %vm331, %v683, 0
  %v694 = vsel %vm335, %v681, 0
  %v697 = vsel %vm335, %v682, 0
  %699 = vmatprep.subr.bf16.mxu0 %v674
  %700 = vmatpush1.bf16.msra.mxu0 %v673
  %701 = vmatprep.subr.bf16.mxu0 %v676
  %702 = vmatpush1.bf16.msra.mxu0 %v675
  %703 = vmatprep.subr.bf16.mxu0 %v678
  %704 = vmatpush1.bf16.msra.mxu0 %v677
  %705 = vmatprep.subr.bf16.mxu0 %v680
  %706 = vmatpush1.bf16.msra.mxu0 %v679
  %707 = vmatprep.subr.bf16.mxu0 %v697
  %708 = vmatpush1.bf16.msra.mxu0 %v694
  %709 = vmatprep.subr.bf16.mxu0 0
  %710 = vmatpush1.bf16.msra.mxu0 0
  %711 = vmatprep.subr.bf16.mxu0 0
  %712 = vmatpush1.bf16.msra.mxu0 0
  %713 = vmatprep.subr.bf16.mxu0 0
  %714 = vmatpush1.bf16.msra.mxu0 0
  %715 = vmatprep.subr.bf16.mxu0 0
  %716 = vmatpush1.bf16.msra.mxu0 0
  %717 = vmatprep.subr.bf16.mxu0 0
  %718 = vmatpush1.bf16.msra.mxu0 0
  %719 = vmatprep.subr.bf16.mxu0 0
  %720 = vmatpush1.bf16.msra.mxu0 0
  %721 = vmatprep.subr.bf16.mxu0 0
  %722 = vmatpush1.bf16.msra.mxu0 0
  %723 = vmatprep.subr.bf16.mxu0 0
  %724 = vmatpush1.bf16.msra.mxu0 0
  %725 = vmatprep.subr.bf16.mxu0 0
  %726 = vmatpush1.bf16.msra.mxu0 0
  %727 = vmatprep.subr.bf16.mxu0 0
  %728 = vmatpush1.bf16.msra.mxu0 0
  %729 = vmatprep.subr.bf16.mxu0 0
  %730 = vmatpush1.bf16.msra.mxu0 0
  %731 = vmatprep.mubr.bf16.mxu0 0
  %732 = vmatmul.mubr.bf16.gmra.mrb[0].mxu0 %v691
  %v733 = vpop.f32.mrb[0].mxu0
  %v734 = vadd.f32 %v688, %v733
  %v735 = vpop.f32.mrb[0].mxu0
  %v736 = vadd.f32 %v688, %v735
  %v737 = vpop.f32.mrb[0].mxu0
  %v738 = vpop.f32.mrb[0].mxu0
  %739 = vdwg.mxu0
  %v740 = vsel %vm335, %v734, %v134
  %v741 = vsel %vm335, %v736, %v136
  %742 = vrot.lane.b32.xlu0 %v740, 17
  %v743 = vpop.permute.xlu0 %742
  %744 = vrot.lane.b32.xlu0 %v741, 17
  %v745 = vpop.permute.xlu0 %744
  %v746 = vsel %vm146, %v743, %v745
  %v747 = vsel %vm146, %v745, %v743
  %v748 = vmul.f32 %v747, %v152
  %v749 = vmul.f32 %v746, %v156
  %750 = vst [vmem:[#allocation2] sm:$0xff] %v748
  %751 = vst [vmem:[#allocation2 + $0x8] sm:$0xff] %v749
  %752 = vrot.lane.b32.xlu0 %v740, 16
  %v753 = vpop.permute.xlu0 %752
  %754 = vrot.lane.b32.xlu0 %v741, 16
  %v755 = vpop.permute.xlu0 %754
  %v756 = vsel %vm165, %v753, %v755
  %v757 = vsel %vm165, %v755, %v753
  %v758 = vmul.f32 %v757, %v171
  %v759 = vmul.f32 %v756, %v175
  %760 = vst [vmem:[#allocation2 + $0x10] sm:$0xff] %v758
  %761 = vst [vmem:[#allocation2 + $0x18] sm:$0xff] %v759
  %762 = vrot.lane.b32.xlu0 %v740, 15
  %v763 = vpop.permute.xlu0 %762
  %764 = vrot.lane.b32.xlu0 %v741, 15
  %v765 = vpop.permute.xlu0 %764
  %v766 = vsel %vm184, %v763, %v765
  %v767 = vsel %vm184, %v765, %v763
  %v768 = vmul.f32 %v767, %v190
  %v769 = vmul.f32 %v766, %v194
  %770 = vst [vmem:[#allocation2 + $0x20] sm:$0xff] %v768
  %771 = vst [vmem:[#allocation2 + $0x28] sm:$0xff] %v769
  %772 = vrot.lane.b32.xlu0 %v740, 1
  %v773 = vpop.permute.xlu0 %772
  %774 = vrot.lane.b32.xlu0 %v741, 1
  %v775 = vpop.permute.xlu0 %774
  %v776 = vsel %vm203, %v773, %v775
  %v777 = vsel %vm203, %v775, %v773
  %v778 = vmul.f32 %v777, %v209
  %v779 = vmul.f32 %v776, %v213
  %780 = vst [vmem:[#allocation2 + $0x30] sm:$0xff] %v778
  %781 = vst [vmem:[#allocation2 + $0x38] sm:$0xff] %v779
  %782 = vst [vmem:[#allocation2 + $0x40] sm:$0xff] %v740
  %783 = vst [vmem:[#allocation2 + $0x48] sm:$0xff] %v741
  %784 = vrot.lane.b32.xlu0 %v740, 127
  %v785 = vpop.permute.xlu0 %784
  %786 = vrot.lane.b32.xlu0 %v741, 127
  %v787 = vpop.permute.xlu0 %786
  %v788 = vsel %vm224, %v785, %v787
  %v789 = vsel %vm224, %v787, %v785
  %v790 = vmul.f32 %v788, %v230
  %v791 = vmul.f32 %v789, %v234
  %792 = vst [vmem:[#allocation2 + $0x50] sm:$0xff] %v790
  %793 = vst [vmem:[#allocation2 + $0x58] sm:$0xff] %v791
  %794 = vrot.lane.b32.xlu0 %v740, 113
  %v795 = vpop.permute.xlu0 %794
  %796 = vrot.lane.b32.xlu0 %v741, 113
  %v797 = vpop.permute.xlu0 %796
  %v798 = vsel %vm243, %v795, %v797
  %v799 = vsel %vm243, %v797, %v795
  %v800 = vmul.f32 %v798, %v249
  %v801 = vmul.f32 %v799, %v253
  %802 = vst [vmem:[#allocation2 + $0x60] sm:$0xff] %v800
  %803 = vst [vmem:[#allocation2 + $0x68] sm:$0xff] %v801
  %804 = vrot.lane.b32.xlu0 %v740, 112
  %v805 = vpop.permute.xlu0 %804
  %806 = vrot.lane.b32.xlu0 %v741, 112
  %v807 = vpop.permute.xlu0 %806
  %v808 = vsel %vm262, %v805, %v807
  %v809 = vsel %vm262, %v807, %v805
  %v810 = vmul.f32 %v808, %v268
  %v811 = vmul.f32 %v809, %v272
  %812 = vst [vmem:[#allocation2 + $0x70] sm:$0xff] %v810
  %813 = vst [vmem:[#allocation2 + $0x78] sm:$0xff] %v811
  %814 = vrot.lane.b32.xlu0 %v740, 111
  %v815 = vpop.permute.xlu0 %814
  %816 = vrot.lane.b32.xlu0 %v741, 111
  %v817 = vpop.permute.xlu0 %816
  %v818 = vsel %vm281, %v815, %v817
  %v819 = vsel %vm281, %v817, %v815
  %v820 = vmul.f32 %v818, %v287
  %v821 = vmul.f32 %v819, %v291
  %822 = vst [vmem:[#allocation2 + $0x80] sm:$0xff] %v820
  %823 = vst [vmem:[#allocation2 + $0x88] sm:$0xff] %v821
  %v824 = vld [vmem:[#allocation2] sm:$0xff]
  %v825 = vld [vmem:[#allocation2 + $0x8] sm:$0xff]
  %v826 = vld [vmem:[#allocation2 + $0x10] sm:$0xff]
  %v827 = vld [vmem:[#allocation2 + $0x18] sm:$0xff]
  %v828 = vld [vmem:[#allocation2 + $0x20] sm:$0xff]
  %v829 = vld [vmem:[#allocation2 + $0x28] sm:$0xff]
  %v830 = vld [vmem:[#allocation2 + $0x30] sm:$0xff]
  %v831 = vld [vmem:[#allocation2 + $0x38] sm:$0xff]
  %v832 = vld [vmem:[#allocation2 + $0x40] sm:$0xff]
  %v833 = vld [vmem:[#allocation2 + $0x48] sm:$0xff]
  %v834 = vld [vmem:[#allocation2 + $0x50] sm:$0xff]
  %v835 = vld [vmem:[#allocation2 + $0x58] sm:$0xff]
  %v836 = vld [vmem:[#allocation2 + $0x60] sm:$0xff]
  %v837 = vld [vmem:[#allocation2 + $0x68] sm:$0xff]
  %v838 = vld [vmem:[#allocation2 + $0x70] sm:$0xff]
  %v839 = vld [vmem:[#allocation2 + $0x78] sm:$0xff]
  %v840 = vld [vmem:[#allocation2 + $0x80] sm:$0xff]
  %v841 = vld [vmem:[#allocation2 + $0x88] sm:$0xff]
  %v842 = vpack.c.bf16 %v826, %v824
  %v843 = vpack.c.bf16 %v827, %v825
  %v844 = vpack.c.bf16 %v830, %v828
  %v845 = vpack.c.bf16 %v831, %v829
  %v846 = vpack.c.bf16 %v834, %v832
  %v847 = vpack.c.bf16 %v835, %v833
  %v848 = vpack.c.bf16 %v838, %v836
  %v849 = vpack.c.bf16 %v839, %v837
  %v850 = vpack.c.bf16 %v840, %v840
  %v851 = vpack.c.bf16 %v841, %v841
  %v852 = vld [vmem:[%s6] sm:$0xf]
  %v853 = vld [vmem:[%s7] sm:$0xff]
  %855 = vset.pattern.permute.xlu0 0
  %856 = vperm.xlu0 %855, %v853
  %v857 = vpop.permute.xlu0 %856
  %v860 = vsel %vm331, %v852, 0
  %v863 = vsel %vm335, %v850, 0
  %v866 = vsel %vm335, %v851, 0
  %868 = vmatprep.subr.bf16.mxu0 %v843
  %869 = vmatpush1.bf16.msra.mxu0 %v842
  %870 = vmatprep.subr.bf16.mxu0 %v845
  %871 = vmatpush1.bf16.msra.mxu0 %v844
  %872 = vmatprep.subr.bf16.mxu0 %v847
  %873 = vmatpush1.bf16.msra.mxu0 %v846
  %874 = vmatprep.subr.bf16.mxu0 %v849
  %875 = vmatpush1.bf16.msra.mxu0 %v848
  %876 = vmatprep.subr.bf16.mxu0 %v866
  %877 = vmatpush1.bf16.msra.mxu0 %v863
  %878 = vmatprep.subr.bf16.mxu0 0
  %879 = vmatpush1.bf16.msra.mxu0 0
  %880 = vmatprep.subr.bf16.mxu0 0
  %881 = vmatpush1.bf16.msra.mxu0 0
  %882 = vmatprep.subr.bf16.mxu0 0
  %883 = vmatpush1.bf16.msra.mxu0 0
  %884 = vmatprep.subr.bf16.mxu0 0
  %885 = vmatpush1.bf16.msra.mxu0 0
  %886 = vmatprep.subr.bf16.mxu0 0
  %887 = vmatpush1.bf16.msra.mxu0 0
  %888 = vmatprep.subr.bf16.mxu0 0
  %889 = vmatpush1.bf16.msra.mxu0 0
  %890 = vmatprep.subr.bf16.mxu0 0
  %891 = vmatpush1.bf16.msra.mxu0 0
  %892 = vmatprep.subr.bf16.mxu0 0
  %893 = vmatpush1.bf16.msra.mxu0 0
  %894 = vmatprep.subr.bf16.mxu0 0
  %895 = vmatpush1.bf16.msra.mxu0 0
  %896 = vmatprep.subr.bf16.mxu0 0
  %897 = vmatpush1.bf16.msra.mxu0 0
  %898 = vmatprep.subr.bf16.mxu0 0
  %899 = vmatpush1.bf16.msra.mxu0 0
  %900 = vmatprep.mubr.bf16.mxu0 0
  %901 = vmatmul.mubr.bf16.gmra.mrb[0].mxu0 %v860
  %v902 = vpop.f32.mrb[0].mxu0
  %v903 = vadd.f32 %v857, %v902
  %v904 = vpop.f32.mrb[0].mxu0
  %v905 = vadd.f32 %v857, %v904
  %v906 = vpop.f32.mrb[0].mxu0
  %v907 = vpop.f32.mrb[0].mxu0
  %908 = vdwg.mxu0
  %s909 = scalar_lea.vmem [#allocation3], 16
  %910 = vst [vmem:[%s909] sm:$0xff] %v903
  %911 = vst [vmem:[%s909 + $0x8] sm:$0xff] %v905
  %v912 = vadd.f32 %v903, %v905
  %913 = vadd.xlane.f32.xlu0 %v912
  %v914 = vpop.xlane.xlu0 %913
  %v915 = vadd.f32 %v563, %v914
  %v916 = vmul.f32 %v903, %v903
  %v917 = vmul.f32 %v905, %v905
  %v918 = vadd.f32 %v916, %v917
  %919 = vadd.xlane.f32.xlu0 %v918
  %v920 = vpop.xlane.xlu0 %919
  %v921 = vadd.f32 %v569, %v920
  %v922 = vrcp.pop 512.0
  %v923 = vmul.f32 %v915, %v922
  %v924 = vmul.f32 %v921, %v922
  %v925 = vmul.f32 %v923, %v923
  %v926 = vsub.f32 %v924, %v925
  %v927 = vmax.f32 %v926, 0.0
  %v928 = vld [vmem:[%s10] sm:$0xff]
  %v929 = vadd.f32 %v927, 1e-05
  %v930 = vrsqrt.pop %v929
  %v931 = vmul.f32 %v928, %v930
  %v932 = vld [vmem:[%s11] sm:$0xff]
  %v933 = vmul.f32 %v923, %v931
  %v934 = vsub.f32 %v932, %v933
  %v935 = vld [vmem:[#allocation3] sm:$0xff]
  %v936 = vld [vmem:[#allocation3 + $0x8] sm:$0xff]
  %938 = vset.pattern.permute.xlu0 0
  %939 = vperm.xlu0 %938, %v931
  %v940 = vpop.permute.xlu0 %939
  %v942 = vmul.f32 %v935, %v940
  %v943 = vmul.f32 %v936, %v940
  %945 = vset.pattern.permute.xlu0 0
  %946 = vperm.xlu0 %945, %v934
  %v947 = vpop.permute.xlu0 %946
  %v949 = vadd.f32 %v942, %v947
  %v950 = vadd.f32 %v943, %v947
  %v951 = vmax.f32 %v949, 0.0
  %v952 = vmax.f32 %v950, 0.0
  %953 = vrot.lane.b32.xlu0 %v951, 17
  %v954 = vpop.permute.xlu0 %953
  %955 = vrot.lane.b32.xlu0 %v952, 17
  %v956 = vpop.permute.xlu0 %955
  %v957 = vsel %vm146, %v954, %v956
  %v958 = vsel %vm146, %v956, %v954
  %v959 = vmul.f32 %v958, %v152
  %v960 = vmul.f32 %v957, %v156
  %961 = vst [vmem:[#allocation2] sm:$0xff] %v959
  %962 = vst [vmem:[#allocation2 + $0x8] sm:$0xff] %v960
  %963 = vrot.lane.b32.xlu0 %v951, 16
  %v964 = vpop.permute.xlu0 %963
  %965 = vrot.lane.b32.xlu0 %v952, 16
  %v966 = vpop.permute.xlu0 %965
  %v967 = vsel %vm165, %v964, %v966
  %v968 = vsel %vm165, %v966, %v964
  %v969 = vmul.f32 %v968, %v171
  %v970 = vmul.f32 %v967, %v175
  %971 = vst [vmem:[#allocation2 + $0x10] sm:$0xff] %v969
  %972 = vst [vmem:[#allocation2 + $0x18] sm:$0xff] %v970
  %973 = vrot.lane.b32.xlu0 %v951, 15
  %v974 = vpop.permute.xlu0 %973
  %975 = vrot.lane.b32.xlu0 %v952, 15
  %v976 = vpop.permute.xlu0 %975
  %v977 = vsel %vm184, %v974, %v976
  %v978 = vsel %vm184, %v976, %v974
  %v979 = vmul.f32 %v978, %v190
  %v980 = vmul.f32 %v977, %v194
  %981 = vst [vmem:[#allocation2 + $0x20] sm:$0xff] %v979
  %982 = vst [vmem:[#allocation2 + $0x28] sm:$0xff] %v980
  %983 = vrot.lane.b32.xlu0 %v951, 1
  %v984 = vpop.permute.xlu0 %983
  %985 = vrot.lane.b32.xlu0 %v952, 1
  %v986 = vpop.permute.xlu0 %985
  %v987 = vsel %vm203, %v984, %v986
  %v988 = vsel %vm203, %v986, %v984
  %v989 = vmul.f32 %v988, %v209
  %v990 = vmul.f32 %v987, %v213
  %991 = vst [vmem:[#allocation2 + $0x30] sm:$0xff] %v989
  %992 = vst [vmem:[#allocation2 + $0x38] sm:$0xff] %v990
  %993 = vst [vmem:[#allocation2 + $0x40] sm:$0xff] %v951
  %994 = vst [vmem:[#allocation2 + $0x48] sm:$0xff] %v952
  %995 = vrot.lane.b32.xlu0 %v951, 127
  %v996 = vpop.permute.xlu0 %995
  %997 = vrot.lane.b32.xlu0 %v952, 127
  %v998 = vpop.permute.xlu0 %997
  %v999 = vsel %vm224, %v996, %v998
  %v1000 = vsel %vm224, %v998, %v996
  %v1001 = vmul.f32 %v999, %v230
  %v1002 = vmul.f32 %v1000, %v234
  %1003 = vst [vmem:[#allocation2 + $0x50] sm:$0xff] %v1001
  %1004 = vst [vmem:[#allocation2 + $0x58] sm:$0xff] %v1002
  %1005 = vrot.lane.b32.xlu0 %v951, 113
  %v1006 = vpop.permute.xlu0 %1005
  %1007 = vrot.lane.b32.xlu0 %v952, 113
  %v1008 = vpop.permute.xlu0 %1007
  %v1009 = vsel %vm243, %v1006, %v1008
  %v1010 = vsel %vm243, %v1008, %v1006
  %v1011 = vmul.f32 %v1009, %v249
  %v1012 = vmul.f32 %v1010, %v253
  %1013 = vst [vmem:[#allocation2 + $0x60] sm:$0xff] %v1011
  %1014 = vst [vmem:[#allocation2 + $0x68] sm:$0xff] %v1012
  %1015 = vrot.lane.b32.xlu0 %v951, 112
  %v1016 = vpop.permute.xlu0 %1015
  %1017 = vrot.lane.b32.xlu0 %v952, 112
  %v1018 = vpop.permute.xlu0 %1017
  %v1019 = vsel %vm262, %v1016, %v1018
  %v1020 = vsel %vm262, %v1018, %v1016
  %v1021 = vmul.f32 %v1019, %v268
  %v1022 = vmul.f32 %v1020, %v272
  %1023 = vst [vmem:[#allocation2 + $0x70] sm:$0xff] %v1021
  %1024 = vst [vmem:[#allocation2 + $0x78] sm:$0xff] %v1022
  %1025 = vrot.lane.b32.xlu0 %v951, 111
  %v1026 = vpop.permute.xlu0 %1025
  %1027 = vrot.lane.b32.xlu0 %v952, 111
  %v1028 = vpop.permute.xlu0 %1027
  %v1029 = vsel %vm281, %v1026, %v1028
  %v1030 = vsel %vm281, %v1028, %v1026
  %v1031 = vmul.f32 %v1029, %v287
  %v1032 = vmul.f32 %v1030, %v291
  %1033 = vst [vmem:[#allocation2 + $0x80] sm:$0xff] %v1031
  %1034 = vst [vmem:[#allocation2 + $0x88] sm:$0xff] %v1032
  %v1035 = vld [vmem:[#allocation2] sm:$0xff]
  %v1036 = vld [vmem:[#allocation2 + $0x8] sm:$0xff]
  %v1037 = vld [vmem:[#allocation2 + $0x10] sm:$0xff]
  %v1038 = vld [vmem:[#allocation2 + $0x18] sm:$0xff]
  %v1039 = vld [vmem:[#allocation2 + $0x20] sm:$0xff]
  %v1040 = vld [vmem:[#allocation2 + $0x28] sm:$0xff]
  %v1041 = vld [vmem:[#allocation2 + $0x30] sm:$0xff]
  %v1042 = vld [vmem:[#allocation2 + $0x38] sm:$0xff]
  %v1043 = vld [vmem:[#allocation2 + $0x40] sm:$0xff]
  %v1044 = vld [vmem:[#allocation2 + $0x48] sm:$0xff]
  %v1045 = vld [vmem:[#allocation2 + $0x50] sm:$0xff]
  %v1046 = vld [vmem:[#allocation2 + $0x58] sm:$0xff]
  %v1047 = vld [vmem:[#allocation2 + $0x60] sm:$0xff]
  %v1048 = vld [vmem:[#allocation2 + $0x68] sm:$0xff]
  %v1049 = vld [vmem:[#allocation2 + $0x70] sm:$0xff]
  %v1050 = vld [vmem:[#allocation2 + $0x78] sm:$0xff]
  %v1051 = vld [vmem:[#allocation2 + $0x80] sm:$0xff]
  %v1052 = vld [vmem:[#allocation2 + $0x88] sm:$0xff]
  %v1053 = vpack.c.bf16 %v1037, %v1035
  %v1054 = vpack.c.bf16 %v1038, %v1036
  %v1055 = vpack.c.bf16 %v1041, %v1039
  %v1056 = vpack.c.bf16 %v1042, %v1040
  %v1057 = vpack.c.bf16 %v1045, %v1043
  %v1058 = vpack.c.bf16 %v1046, %v1044
  %v1059 = vpack.c.bf16 %v1049, %v1047
  %v1060 = vpack.c.bf16 %v1050, %v1048
  %v1061 = vpack.c.bf16 %v1051, %v1051
  %v1062 = vpack.c.bf16 %v1052, %v1052
  %v1063 = vld [vmem:[%s8] sm:$0xf]
  %v1064 = vld [vmem:[%s9] sm:$0xff]
  %1066 = vset.pattern.permute.xlu0 0
  %1067 = vperm.xlu0 %1066, %v1064
  %v1068 = vpop.permute.xlu0 %1067
  %v1071 = vsel %vm331, %v1063, 0
  %v1074 = vsel %vm335, %v1061, 0
  %v1077 = vsel %vm335, %v1062, 0
  %1079 = vmatprep.subr.bf16.mxu0 %v1054
  %1080 = vmatpush1.bf16.msra.mxu0 %v1053
  %1081 = vmatprep.subr.bf16.mxu0 %v1056
  %1082 = vmatpush1.bf16.msra.mxu0 %v1055
  %1083 = vmatprep.subr.bf16.mxu0 %v1058
  %1084 = vmatpush1.bf16.msra.mxu0 %v1057
  %1085 = vmatprep.subr.bf16.mxu0 %v1060
  %1086 = vmatpush1.bf16.msra.mxu0 %v1059
  %1087 = vmatprep.subr.bf16.mxu0 %v1077
  %1088 = vmatpush1.bf16.msra.mxu0 %v1074
  %1089 = vmatprep.subr.bf16.mxu0 0
  %1090 = vmatpush1.bf16.msra.mxu0 0
  %1091 = vmatprep.subr.bf16.mxu0 0
  %1092 = vmatpush1.bf16.msra.mxu0 0
  %1093 = vmatprep.subr.bf16.mxu0 0
  %1094 = vmatpush1.bf16.msra.mxu0 0
  %1095 = vmatprep.subr.bf16.mxu0 0
  %1096 = vmatpush1.bf16.msra.mxu0 0
  %1097 = vmatprep.subr.bf16.mxu0 0
  %1098 = vmatpush1.bf16.msra.mxu0 0
  %1099 = vmatprep.subr.bf16.mxu0 0
  %1100 = vmatpush1.bf16.msra.mxu0 0
  %1101 = vmatprep.subr.bf16.mxu0 0
  %1102 = vmatpush1.bf16.msra.mxu0 0
  %1103 = vmatprep.subr.bf16.mxu0 0
  %1104 = vmatpush1.bf16.msra.mxu0 0
  %1105 = vmatprep.subr.bf16.mxu0 0
  %1106 = vmatpush1.bf16.msra.mxu0 0
  %1107 = vmatprep.subr.bf16.mxu0 0
  %1108 = vmatpush1.bf16.msra.mxu0 0
  %1109 = vmatprep.subr.bf16.mxu0 0
  %1110 = vmatpush1.bf16.msra.mxu0 0
  %1111 = vmatprep.mubr.bf16.mxu0 0
  %1112 = vmatmul.mubr.bf16.gmra.mrb[0].mxu0 %v1071
  %v1113 = vpop.f32.mrb[0].mxu0
  %v1114 = vadd.f32 %v1068, %v1113
  %v1115 = vpop.f32.mrb[0].mxu0
  %v1116 = vadd.f32 %v1068, %v1115
  %v1117 = vpop.f32.mrb[0].mxu0
  %v1118 = vpop.f32.mrb[0].mxu0
  %1119 = vdwg.mxu0
  %1120 = vst [vmem:[%s12] sm:$0xff] %v1114
  %1121 = vst [vmem:[%s12 + $0x8] sm:$0xff] %v1116
  %v1122 = vadd.f32 %v1114, %v1116
  %1123 = vadd.xlane.f32.xlu0 %v1122
  %v1124 = vpop.xlane.xlu0 %1123
  %v1125 = vadd.f32 %v1124, 0.0
  %v1126 = vmul.f32 %v1114, %v1114
  %v1127 = vmul.f32 %v1116, %v1116
  %v1128 = vadd.f32 %v1126, %v1127
  %1129 = vadd.xlane.f32.xlu0 %v1128
  %v1130 = vpop.xlane.xlu0 %1129
  %v1131 = vadd.f32 %v1130, 0.0
  %v1132 = vld [vmem:[%s909] sm:$0xff]
  %v1133 = vld [vmem:[%s909 + $0x8] sm:$0xff]
  %v1134 = vmul.f32 %v1132, %v940
  %v1135 = vmul.f32 %v1133, %v940
  %v1136 = vadd.f32 %v1134, %v947
  %v1137 = vadd.f32 %v1135, %v947
  %v1138 = vmax.f32 %v1136, 0.0
  %v1139 = vmax.f32 %v1137, 0.0
  %1140 = vrot.lane.b32.xlu0 %v1138, 17
  %v1141 = vpop.permute.xlu0 %1140
  %1142 = vrot.lane.b32.xlu0 %v1139, 17
  %v1143 = vpop.permute.xlu0 %1142
  %v1144 = vsel %vm146, %v1141, %v1143
  %v1145 = vsel %vm146, %v1143, %v1141
  %v1146 = vmul.f32 %v1145, %v152
  %v1147 = vmul.f32 %v1144, %v156
  %1148 = vst [vmem:[#allocation2] sm:$0xff] %v1146
  %1149 = vst [vmem:[#allocation2 + $0x8] sm:$0xff] %v1147
  %1150 = vrot.lane.b32.xlu0 %v1138, 16
  %v1151 = vpop.permute.xlu0 %1150
  %1152 = vrot.lane.b32.xlu0 %v1139, 16
  %v1153 = vpop.permute.xlu0 %1152
  %v1154 = vsel %vm165, %v1151, %v1153
  %v1155 = vsel %vm165, %v1153, %v1151
  %v1156 = vmul.f32 %v1155, %v171
  %v1157 = vmul.f32 %v1154, %v175
  %1158 = vst [vmem:[#allocation2 + $0x10] sm:$0xff] %v1156
  %1159 = vst [vmem:[#allocation2 + $0x18] sm:$0xff] %v1157
  %1160 = vrot.lane.b32.xlu0 %v1138, 15
  %v1161 = vpop.permute.xlu0 %1160
  %1162 = vrot.lane.b32.xlu0 %v1139, 15
  %v1163 = vpop.permute.xlu0 %1162
  %v1164 = vsel %vm184, %v1161, %v1163
  %v1165 = vsel %vm184, %v1163, %v1161
  %v1166 = vmul.f32 %v1165, %v190
  %v1167 = vmul.f32 %v1164, %v194
  %1168 = vst [vmem:[#allocation2 + $0x20] sm:$0xff] %v1166
  %1169 = vst [vmem:[#allocation2 + $0x28] sm:$0xff] %v1167
  %1170 = vrot.lane.b32.xlu0 %v1138, 1
  %v1171 = vpop.permute.xlu0 %1170
  %1172 = vrot.lane.b32.xlu0 %v1139, 1
  %v1173 = vpop.permute.xlu0 %1172
  %v1174 = vsel %vm203, %v1171, %v1173
  %v1175 = vsel %vm203, %v1173, %v1171
  %v1176 = vmul.f32 %v1175, %v209
  %v1177 = vmul.f32 %v1174, %v213
  %1178 = vst [vmem:[#allocation2 + $0x30] sm:$0xff] %v1176
  %1179 = vst [vmem:[#allocation2 + $0x38] sm:$0xff] %v1177
  %1180 = vst [vmem:[#allocation2 + $0x40] sm:$0xff] %v1138
  %1181 = vst [vmem:[#allocation2 + $0x48] sm:$0xff] %v1139
  %1182 = vrot.lane.b32.xlu0 %v1138, 127
  %v1183 = vpop.permute.xlu0 %1182
  %1184 = vrot.lane.b32.xlu0 %v1139, 127
  %v1185 = vpop.permute.xlu0 %1184
  %v1186 = vsel %vm224, %v1183, %v1185
  %v1187 = vsel %vm224, %v1185, %v1183
  %v1188 = vmul.f32 %v1186, %v230
  %v1189 = vmul.f32 %v1187, %v234
  %1190 = vst [vmem:[#allocation2 + $0x50] sm:$0xff] %v1188
  %1191 = vst [vmem:[#allocation2 + $0x58] sm:$0xff] %v1189
  %1192 = vrot.lane.b32.xlu0 %v1138, 113
  %v1193 = vpop.permute.xlu0 %1192
  %1194 = vrot.lane.b32.xlu0 %v1139, 113
  %v1195 = vpop.permute.xlu0 %1194
  %v1196 = vsel %vm243, %v1193, %v1195
  %v1197 = vsel %vm243, %v1195, %v1193
  %v1198 = vmul.f32 %v1196, %v249
  %v1199 = vmul.f32 %v1197, %v253
  %1200 = vst [vmem:[#allocation2 + $0x60] sm:$0xff] %v1198
  %1201 = vst [vmem:[#allocation2 + $0x68] sm:$0xff] %v1199
  %1202 = vrot.lane.b32.xlu0 %v1138, 112
  %v1203 = vpop.permute.xlu0 %1202
  %1204 = vrot.lane.b32.xlu0 %v1139, 112
  %v1205 = vpop.permute.xlu0 %1204
  %v1206 = vsel %vm262, %v1203, %v1205
  %v1207 = vsel %vm262, %v1205, %v1203
  %v1208 = vmul.f32 %v1206, %v268
  %v1209 = vmul.f32 %v1207, %v272
  %1210 = vst [vmem:[#allocation2 + $0x70] sm:$0xff] %v1208
  %1211 = vst [vmem:[#allocation2 + $0x78] sm:$0xff] %v1209
  %1212 = vrot.lane.b32.xlu0 %v1138, 111
  %v1213 = vpop.permute.xlu0 %1212
  %1214 = vrot.lane.b32.xlu0 %v1139, 111
  %v1215 = vpop.permute.xlu0 %1214
  %v1216 = vsel %vm281, %v1213, %v1215
  %v1217 = vsel %vm281, %v1215, %v1213
  %v1218 = vmul.f32 %v1216, %v287
  %v1219 = vmul.f32 %v1217, %v291
  %1220 = vst [vmem:[#allocation2 + $0x80] sm:$0xff] %v1218
  %1221 = vst [vmem:[#allocation2 + $0x88] sm:$0xff] %v1219
  %v1222 = vld [vmem:[#allocation2] sm:$0xff]
  %v1223 = vld [vmem:[#allocation2 + $0x8] sm:$0xff]
  %v1224 = vld [vmem:[#allocation2 + $0x10] sm:$0xff]
  %v1225 = vld [vmem:[#allocation2 + $0x18] sm:$0xff]
  %v1226 = vld [vmem:[#allocation2 + $0x20] sm:$0xff]
  %v1227 = vld [vmem:[#allocation2 + $0x28] sm:$0xff]
  %v1228 = vld [vmem:[#allocation2 + $0x30] sm:$0xff]
  %v1229 = vld [vmem:[#allocation2 + $0x38] sm:$0xff]
  %v1230 = vld [vmem:[#allocation2 + $0x40] sm:$0xff]
  %v1231 = vld [vmem:[#allocation2 + $0x48] sm:$0xff]
  %v1232 = vld [vmem:[#allocation2 + $0x50] sm:$0xff]
  %v1233 = vld [vmem:[#allocation2 + $0x58] sm:$0xff]
  %v1234 = vld [vmem:[#allocation2 + $0x60] sm:$0xff]
  %v1235 = vld [vmem:[#allocation2 + $0x68] sm:$0xff]
  %v1236 = vld [vmem:[#allocation2 + $0x70] sm:$0xff]
  %v1237 = vld [vmem:[#allocation2 + $0x78] sm:$0xff]
  %v1238 = vld [vmem:[#allocation2 + $0x80] sm:$0xff]
  %v1239 = vld [vmem:[#allocation2 + $0x88] sm:$0xff]
  %v1240 = vpack.c.bf16 %v1224, %v1222
  %v1241 = vpack.c.bf16 %v1225, %v1223
  %v1242 = vpack.c.bf16 %v1228, %v1226
  %v1243 = vpack.c.bf16 %v1229, %v1227
  %v1244 = vpack.c.bf16 %v1232, %v1230
  %v1245 = vpack.c.bf16 %v1233, %v1231
  %v1246 = vpack.c.bf16 %v1236, %v1234
  %v1247 = vpack.c.bf16 %v1237, %v1235
  %v1248 = vpack.c.bf16 %v1238, %v1238
  %v1249 = vpack.c.bf16 %v1239, %v1239
  %v1250 = vld [vmem:[%s8] sm:$0xf]
  %v1251 = vld [vmem:[%s9] sm:$0xff]
  %1253 = vset.pattern.permute.xlu0 0
  %1254 = vperm.xlu0 %1253, %v1251
  %v1255 = vpop.permute.xlu0 %1254
  %v1258 = vsel %vm331, %v1250, 0
  %v1261 = vsel %vm335, %v1248, 0
  %v1264 = vsel %vm335, %v1249, 0
  %1266 = vmatprep.subr.bf16.mxu0 %v1241
  %1267 = vmatpush1.bf16.msra.mxu0 %v1240
  %1268 = vmatprep.subr.bf16.mxu0 %v1243
  %1269 = vmatpush1.bf16.msra.mxu0 %v1242
  %1270 = vmatprep.subr.bf16.mxu0 %v1245
  %1271 = vmatpush1.bf16.msra.mxu0 %v1244
  %1272 = vmatprep.subr.bf16.mxu0 %v1247
  %1273 = vmatpush1.bf16.msra.mxu0 %v1246
  %1274 = vmatprep.subr.bf16.mxu0 %v1264
  %1275 = vmatpush1.bf16.msra.mxu0 %v1261
  %1276 = vmatprep.subr.bf16.mxu0 0
  %1277 = vmatpush1.bf16.msra.mxu0 0
  %1278 = vmatprep.subr.bf16.mxu0 0
  %1279 = vmatpush1.bf16.msra.mxu0 0
  %1280 = vmatprep.subr.bf16.mxu0 0
  %1281 = vmatpush1.bf16.msra.mxu0 0
  %1282 = vmatprep.subr.bf16.mxu0 0
  %1283 = vmatpush1.bf16.msra.mxu0 0
  %1284 = vmatprep.subr.bf16.mxu0 0
  %1285 = vmatpush1.bf16.msra.mxu0 0
  %1286 = vmatprep.subr.bf16.mxu0 0
  %1287 = vmatpush1.bf16.msra.mxu0 0
  %1288 = vmatprep.subr.bf16.mxu0 0
  %1289 = vmatpush1.bf16.msra.mxu0 0
  %1290 = vmatprep.subr.bf16.mxu0 0
  %1291 = vmatpush1.bf16.msra.mxu0 0
  %1292 = vmatprep.subr.bf16.mxu0 0
  %1293 = vmatpush1.bf16.msra.mxu0 0
  %1294 = vmatprep.subr.bf16.mxu0 0
  %1295 = vmatpush1.bf16.msra.mxu0 0
  %1296 = vmatprep.subr.bf16.mxu0 0
  %1297 = vmatpush1.bf16.msra.mxu0 0
  %1298 = vmatprep.mubr.bf16.mxu0 0
  %1299 = vmatmul.mubr.bf16.gmra.mrb[0].mxu0 %v1258
  %v1300 = vpop.f32.mrb[0].mxu0
  %v1301 = vadd.f32 %v1255, %v1300
  %v1302 = vpop.f32.mrb[0].mxu0
  %v1303 = vadd.f32 %v1255, %v1302
  %v1304 = vpop.f32.mrb[0].mxu0
  %v1305 = vpop.f32.mrb[0].mxu0
  %1306 = vdwg.mxu0
  %s1307 = scalar_lea.vmem %s12, 16
  %1308 = vst [vmem:[%s1307] sm:$0xff] %v1301
  %1309 = vst [vmem:[%s1307 + $0x8] sm:$0xff] %v1303
  %v1310 = vadd.f32 %v1301, %v1303
  %1311 = vadd.xlane.f32.xlu0 %v1310
  %v1312 = vpop.xlane.xlu0 %1311
  %v1313 = vadd.f32 %v1125, %v1312
  %v1314 = vmul.f32 %v1301, %v1301
  %v1315 = vmul.f32 %v1303, %v1303
  %v1316 = vadd.f32 %v1314, %v1315
  %1317 = vadd.xlane.f32.xlu0 %v1316
  %v1318 = vpop.xlane.xlu0 %1317
  %v1319 = vadd.f32 %v1131, %v1318
  %v1320 = vmul.f32 %v1313, %v922
  %v1321 = vmul.f32 %v1319, %v922
  %v1322 = vmul.f32 %v1320, %v1320
  %v1323 = vsub.f32 %v1321, %v1322
  %v1324 = vmax.f32 %v1323, 0.0
  %v1325 = vld [vmem:[%s10] sm:$0xff]
  %v1326 = vadd.f32 %v1324, 1e-05
  %v1327 = vrsqrt.pop %v1326
  %v1328 = vmul.f32 %v1325, %v1327
  %v1329 = vld [vmem:[%s11] sm:$0xff]
  %v1330 = vmul.f32 %v1320, %v1328
  %v1331 = vsub.f32 %v1329, %v1330
  %v1332 = vld [vmem:[%s12] sm:$0xff]
  %v1333 = vld [vmem:[%s12 + $0x8] sm:$0xff]
  %1335 = vset.pattern.permute.xlu0 0
  %1336 = vperm.xlu0 %1335, %v1328
  %v1337 = vpop.permute.xlu0 %1336
  %v1339 = vmul.f32 %v1332, %v1337
  %v1340 = vmul.f32 %v1333, %v1337
  %1342 = vset.pattern.permute.xlu0 0
  %1343 = vperm.xlu0 %1342, %v1331
  %v1344 = vpop.permute.xlu0 %1343
  %v1346 = vadd.f32 %v1339, %v1344
  %v1347 = vadd.f32 %v1340, %v1344
  %v1348 = vmax.f32 %v1346, 0.0
  %v1349 = vmax.f32 %v1347, 0.0
  %1350 = vst [vmem:[%s12] sm:$0xff] %v1348
  %1351 = vst [vmem:[%s12 + $0x8] sm:$0xff] %v1349
  %v1352 = vld [vmem:[%s1307] sm:$0xff]
  %v1353 = vld [vmem:[%s1307 + $0x8] sm:$0xff]
  %v1354 = vmul.f32 %v1352, %v1337
  %v1355 = vmul.f32 %v1353, %v1337
  %v1356 = vadd.f32 %v1354, %v1344
  %v1357 = vadd.f32 %v1355, %v1344
  %v1358 = vmax.f32 %v1356, 0.0
  %v1359 = vmax.f32 %v1357, 0.0
  %1360 = vst [vmem:[%s1307] sm:$0xff] %v1358
  %1361 = vst [vmem:[%s1307 + $0x8] sm:$0xff] %v1359
  // Predicated region
  $region50: #{up_forward.1} parent=0 // pred_check
    _
  $region51: #{up_forward.1} parent=0 // pred_check_branch
    %1363 = sbr.rel (0) target = $region53
  $region52: #{up_forward.1} parent=0 // pred_region
    _
  $region53: #{up_forward.1} parent=0 // pred_fallthru
    _
  // Predicated region
  $region54: #{up_forward.1} parent=0 // pred_check
    _
  $region55: #{up_forward.1} parent=0 // pred_check_branch
    %1365 = sbr.rel (0) target = $region57
  $region56: #{up_forward.1} parent=0 // pred_region
    _
  $region57: #{up_forward.1} parent=0 // pred_fallthru
    _

</llo_original>
